<compile_context>
chip_gen: v7x
topology: tpu7x:2x2x1
jax: 0.10.0
libtpu: 0.0.40
codegen_flags: <defaults>
</compile_context>

<pallas_src>
import functools

import jax
import jax.numpy as jnp
from jax.experimental import pallas as pl
from jax.experimental.pallas import tpu as pltpu


def _round_up(x, m):
    return (x + m - 1) // m * m


def gru_kernel(x_ref,
               wx_ref, whzr_ref, whh_ref, bzrh_ref,
               wfc_ref, bfc_ref,
               h_out_ref, y_out_ref,
               h_state, xg_buf,
               *, tt, batch, hp, compute_dtype):
    """One grid step = one block of `tt` timesteps.

    x_ref    : (1, tt*batch, D_in)            compute_dtype
    wx_ref   : (D_in, 3*hp)                   compute_dtype  [W_xz | W_xr | W_xh]
    whzr_ref : (hp, 2*hp)                     compute_dtype  [W_hz | W_hr]
    whh_ref  : (hp, hp)                       compute_dtype
    bzrh_ref : (1, 3*hp)                      f32            [b_z | b_r | b_h]
    wfc_ref  : (hp, dp)                       compute_dtype
    bfc_ref  : (1, dp)                        f32
    h_out_ref: (1, tt*batch, hp)              f32 output
    y_out_ref: (1, tt*batch, dp)              f32 output
    h_state  : (batch, hp)      VMEM scratch  f32 (carried across grid steps)
    xg_buf   : (tt*batch, 3*hp) VMEM scratch  f32 (hoisted x-side preactivations)
    """
    @pl.when(pl.program_id(0) == 0)
    def _():
        # PyTorch H=None: Z's H-term is dropped, then H := zeros. h=0 is identical.
        h_state[...] = jnp.zeros_like(h_state)

    # --- Hoisted input-side matmul for the whole time block (one big MXU op) ---
    xg_buf[...] = (jnp.dot(x_ref[0], wx_ref[...],
                           preferred_element_type=jnp.float32)
                   + bzrh_ref[...])

    # --- Serial recurrence over the time block; h carried in registers --------
    h = h_state[...]                                     # (batch, hp) f32
    for t in range(tt):                                  # static unroll
        g = xg_buf[pl.ds(t * batch, batch), :]           # (batch, 3*hp) f32
        hc = h.astype(compute_dtype)
        hzr = jnp.dot(hc, whzr_ref[...], preferred_element_type=jnp.float32)
        z = jax.nn.sigmoid(g[:, :hp] + hzr[:, :hp])
        r = jax.nn.sigmoid(g[:, hp:2 * hp] + hzr[:, hp:])
        rh = (r * h).astype(compute_dtype)
        h_tilda = jnp.tanh(
            g[:, 2 * hp:]
            + jnp.dot(rh, whh_ref[...], preferred_element_type=jnp.float32))
        h = h_tilda + z * (h - h_tilda)                  # == z*h + (1-z)*h_tilda
        h_out_ref[0, pl.ds(t * batch, batch), :] = h

    h_state[...] = h

    # --- Block readout fc(relu(H)) as one dense matmul -------------------------
    h_blk = jnp.maximum(h_out_ref[0], 0.0).astype(compute_dtype)
    y_out_ref[0] = (jnp.dot(h_blk, wfc_ref[...],
                            preferred_element_type=jnp.float32)
                    + bfc_ref[...])


def gru_forward(inputs, params, *, per_timestep_readout=True, block_t=8,
                compute_dtype=jnp.float32):
    """inputs: (T, B, D_in) float32. Returns (outputs (T,B,H), readouts)."""
    T, B, D_in = inputs.shape
    W_xz, W_hz, b_z, W_xr, W_hr, b_r, W_xh, W_hh, b_h, W_fc, b_fc = params
    H = W_xz.shape[1]
    D_out = W_fc.shape[1]

    f32 = jnp.float32
    Hp = _round_up(H, 128)          # lane-dense hidden width
    Dp = _round_up(D_out, 128)      # lane-dense readout width
    TT = block_t
    T_pad = _round_up(T, TT)
    NT = T_pad // TT
    TTB = TT * B

    def padw(w, rows, cols):
        r0, c0 = w.shape
        return jnp.pad(w.astype(f32), ((0, rows - r0), (0, cols - c0)))

    def padb(b):
        return jnp.pad(b.astype(f32), (0, Hp - H))

    # Fused, zero-padded parameters (padded lanes stay exactly zero through the
    # recurrence, so real lanes are numerically unaffected).
    wx_all = jnp.concatenate(
        [padw(W_xz, D_in, Hp), padw(W_xr, D_in, Hp), padw(W_xh, D_in, Hp)],
        axis=1).astype(compute_dtype)                          # (D_in, 3Hp)
    wh_zr = jnp.concatenate(
        [padw(W_hz, Hp, Hp), padw(W_hr, Hp, Hp)], axis=1).astype(compute_dtype)
    whh_p = padw(W_hh, Hp, Hp).astype(compute_dtype)
    b_all = jnp.concatenate([padb(b_z), padb(b_r), padb(b_h)]).reshape(1, 3 * Hp)
    wfc_p = padw(W_fc, Hp, Dp).astype(compute_dtype)
    bfc_p = jnp.pad(b_fc.astype(f32), (0, Dp - D_out)).reshape(1, Dp)

    # Time-pad and fold (TT, B) into one lane-friendly leading slab dim.
    x_p = jnp.pad(inputs.astype(f32), ((0, T_pad - T), (0, 0), (0, 0)))
    x_blk = x_p.reshape(NT, TTB, D_in).astype(compute_dtype)

    kernel = functools.partial(gru_kernel, tt=TT, batch=B, hp=Hp,
                               compute_dtype=compute_dtype)

    const = lambda shape: pl.BlockSpec(shape, lambda tb: (0,) * len(shape))

    grid_spec = pltpu.PrefetchScalarGridSpec(
        num_scalar_prefetch=0,
        grid=(NT,),
        in_specs=[
            pl.BlockSpec((1, TTB, D_in), lambda tb: (tb, 0, 0)),   # x block
            const((D_in, 3 * Hp)),                                 # W_x_all
            const((Hp, 2 * Hp)),                                   # W_h_zr
            const((Hp, Hp)),                                       # W_hh
            const((1, 3 * Hp)),                                    # b_zrh
            const((Hp, Dp)),                                       # W_fc
            const((1, Dp)),                                        # b_fc
        ],
        out_specs=[
            pl.BlockSpec((1, TTB, Hp), lambda tb: (tb, 0, 0)),
            pl.BlockSpec((1, TTB, Dp), lambda tb: (tb, 0, 0)),
        ],
        scratch_shapes=[
            pltpu.VMEM((B, Hp), jnp.float32),        # carried hidden state
            pltpu.VMEM((TTB, 3 * Hp), jnp.float32),  # hoisted x-side gates
        ],
    )

    out_shape = (
        jax.ShapeDtypeStruct((NT, TTB, Hp), jnp.float32),
        jax.ShapeDtypeStruct((NT, TTB, Dp), jnp.float32),
    )

    h_all, y_all = pl.pallas_call(
        kernel,
        out_shape=out_shape,
        grid_spec=grid_spec,
        compiler_params=pltpu.CompilerParams(
            dimension_semantics=("arbitrary",)),   # time recurrence: sequential
    )(x_blk, wx_all, wh_zr, whh_p, b_all, wfc_p, bfc_p)

    outs = h_all.reshape(T_pad, B, Hp)[:T, :, :H]
    reads = y_all.reshape(T_pad, B, Dp)[:T, :, :D_out]
    if per_timestep_readout:
        return outs, reads
    return outs, reads[-1:]


def gru_reference(inputs, params):
    """Pure-JAX reference mirroring the PyTorch loop."""
    W_xz, W_hz, b_z, W_xr, W_hr, b_r, W_xh, W_hh, b_h, W_fc, b_fc = params
    H = None
    outs, reads = [], []
    for X in inputs:
        Z = jax.nn.sigmoid(X @ W_xz + (H @ W_hz if H is not None else 0.0) + b_z)
        if H is None:
            H = jnp.zeros_like(Z)
        R = jax.nn.sigmoid(X @ W_xr + H @ W_hr + b_r)
        H_tilda = jnp.tanh(X @ W_xh + (R * H) @ W_hh + b_h)
        H = Z * H + (1.0 - Z) * H_tilda
        outs.append(H)
        reads.append(jnp.maximum(H, 0.0) @ W_fc + b_fc)
    return jnp.stack(outs), jnp.stack(reads)


def init_params(key, num_inputs, num_hiddens, num_outputs, sigma=0.01):
    ks = jax.random.split(key, 8)
    W_xz = sigma * jax.random.normal(ks[0], (num_inputs, num_hiddens), jnp.float32)
    W_hz = sigma * jax.random.normal(ks[1], (num_hiddens, num_hiddens), jnp.float32)
    b_z = jnp.zeros((num_hiddens,), jnp.float32)
    W_xr = sigma * jax.random.normal(ks[2], (num_inputs, num_hiddens), jnp.float32)
    W_hr = sigma * jax.random.normal(ks[3], (num_hiddens, num_hiddens), jnp.float32)
    b_r = jnp.zeros((num_hiddens,), jnp.float32)
    W_xh = sigma * jax.random.normal(ks[4], (num_inputs, num_hiddens), jnp.float32)
    W_hh = sigma * jax.random.normal(ks[5], (num_hiddens, num_hiddens), jnp.float32)
    b_h = jnp.zeros((num_hiddens,), jnp.float32)
    # nn.Linear(num_hiddens, num_outputs): y = x @ W.T + b; stored pre-transposed.
    W_fc = jax.random.normal(ks[6], (num_hiddens, num_outputs), jnp.float32) / jnp.sqrt(num_hiddens)
    b_fc = jax.random.normal(ks[7], (num_outputs,), jnp.float32) / jnp.sqrt(num_hiddens)
    return (W_xz, W_hz, b_z, W_xr, W_hr, b_r, W_xh, W_hh, b_h, W_fc, b_fc)


if __name__ == "__main__":
    T, B, D_IN, H, D_OUT = 8, 4, 16, 32, 8
    key = jax.random.PRNGKey(0)
    k_x, k_p = jax.random.split(key)
    inputs = jax.random.normal(k_x, (T, B, D_IN), jnp.float32)
    params = init_params(k_p, D_IN, H, D_OUT)

    ref_outs, ref_reads = gru_reference(inputs, params)

    # f32 weight path (reference-accurate).
    outs, reads = gru_forward(inputs, params)
    jax.block_until_ready((outs, reads))
    assert outs.shape == (T, B, H) and reads.shape == (T, B, D_OUT)
    assert jnp.allclose(outs, ref_outs, atol=1e-4, rtol=1e-4)
    assert jnp.allclose(reads, ref_reads, atol=1e-4, rtol=1e-4)

    # bf16 weight / MXU-input path (v6e/v5e fast path); elementwise math stays f32.
    outs16, reads16 = gru_forward(inputs, params, compute_dtype=jnp.bfloat16)
    jax.block_until_ready((outs16, reads16))
    assert jnp.allclose(outs16, ref_outs, atol=2e-2, rtol=2e-2)
    assert jnp.allclose(reads16, ref_reads, atol=2e-2, rtol=2e-2)

    print("KERNEL_OK")
</pallas_src>

<mosaic_0001>
module attributes {stable_mosaic.version = 11 : i64} {
  func.func @gru_kernel(%arg0: i32, %arg1: memref<1x32x16xf32, #tpu.memory_space<vmem>>, %arg2: memref<16x384xf32, #tpu.memory_space<vmem>>, %arg3: memref<128x256xf32, #tpu.memory_space<vmem>>, %arg4: memref<128x128xf32, #tpu.memory_space<vmem>>, %arg5: memref<1x384xf32, #tpu.memory_space<vmem>>, %arg6: memref<128x128xf32, #tpu.memory_space<vmem>>, %arg7: memref<1x128xf32, #tpu.memory_space<vmem>>, %arg8: memref<1x32x128xf32, #tpu.memory_space<vmem>>, %arg9: memref<1x32x128xf32, #tpu.memory_space<vmem>>, %arg10: memref<4x128xf32, #tpu.memory_space<vmem>>, %arg11: memref<32x384xf32, #tpu.memory_space<vmem>>) attributes {dimension_semantics = [#tpu.dimension_semantics<arbitrary>], iteration_bounds = array<i64: 1>, scalar_prefetch = 0 : i64, scratch_operands = 2 : i64, tpu.core_type = #tpu.core_type<tc>, window_params = [{transform_indices = @transform_0, window_bounds = array<i64: 1, 32, 16>}, {pipeline_mode = #tpu.pipeline_mode<synchronous>, transform_indices = @transform_1, window_bounds = array<i64: 16, 384>}, {pipeline_mode = #tpu.pipeline_mode<synchronous>, transform_indices = @transform_2, window_bounds = array<i64: 128, 256>}, {pipeline_mode = #tpu.pipeline_mode<synchronous>, transform_indices = @transform_3, window_bounds = array<i64: 128, 128>}, {pipeline_mode = #tpu.pipeline_mode<synchronous>, transform_indices = @transform_4, window_bounds = array<i64: 1, 384>}, {pipeline_mode = #tpu.pipeline_mode<synchronous>, transform_indices = @transform_5, window_bounds = array<i64: 128, 128>}, {pipeline_mode = #tpu.pipeline_mode<synchronous>, transform_indices = @transform_6, window_bounds = array<i64: 1, 128>}, {transform_indices = @transform_7, window_bounds = array<i64: 1, 32, 128>}, {transform_indices = @transform_8, window_bounds = array<i64: 1, 32, 128>}]} {
    %c0_i32 = arith.constant 0 : i32
    %0 = arith.cmpi eq, %arg0, %c0_i32 : i32
    %1 = arith.extui %0 : i1 to i32
    %c0_i32_0 = arith.constant 0 : i32
    %2 = arith.cmpi ne, %1, %c0_i32_0 : i32
    scf.if %2 {
      %cst_122 = arith.constant 0.000000e+00 : f32
      %273 = vector.broadcast %cst_122 : f32 to vector<4x128xf32>
      %c0_123 = arith.constant 0 : index
      %c0_124 = arith.constant 0 : index
      %274 = vector.load %arg10[%c0_123, %c0_124] : memref<4x128xf32, #tpu.memory_space<vmem>>, vector<4x128xf32>
      tpu.vector_store %arg10[%c0_123, %c0_124], %273 {strides = array<i32>} : memref<4x128xf32, #tpu.memory_space<vmem>>, vector<4x128xf32>,
    } else {
    }
    %c0 = arith.constant 0 : index
    %c0_1 = arith.constant 0 : index
    %c0_2 = arith.constant 0 : index
    %3 = vector.load %arg1[%c0, %c0_1, %c0_2] : memref<1x32x16xf32, #tpu.memory_space<vmem>>, vector<1x32x16xf32>
    %4 = vector.shape_cast %3 : vector<1x32x16xf32> to vector<32x16xf32>
    %c0_3 = arith.constant 0 : index
    %c0_4 = arith.constant 0 : index
    %5 = vector.load %arg2[%c0_3, %c0_4] : memref<16x384xf32, #tpu.memory_space<vmem>>, vector<16x384xf32>
    %cst = arith.constant dense<0.000000e+00> : vector<32x384xf32>
    %6 = tpu.matmul %4, %5, %cst {dimension_numbers = #tpu.dot_dimension_numbers<[1], [0], [0], [1], [0, 0, 1, 1], [], []>} : vector<32x16xf32>, vector<16x384xf32>, vector<32x384xf32> -> vector<32x384xf32>
    %c0_5 = arith.constant 0 : index
    %c0_6 = arith.constant 0 : index
    %7 = vector.load %arg5[%c0_5, %c0_6] : memref<1x384xf32, #tpu.memory_space<vmem>>, vector<1x384xf32>
    %8 = vector.broadcast %7 : vector<1x384xf32> to vector<32x384xf32>
    %9 = arith.addf %6, %8 : vector<32x384xf32>
    %c0_7 = arith.constant 0 : index
    %c0_8 = arith.constant 0 : index
    %10 = vector.load %arg11[%c0_7, %c0_8] : memref<32x384xf32, #tpu.memory_space<vmem>>, vector<32x384xf32>
    tpu.vector_store %arg11[%c0_7, %c0_8], %9 {strides = array<i32>} : memref<32x384xf32, #tpu.memory_space<vmem>>, vector<32x384xf32>,
    %c0_9 = arith.constant 0 : index
    %c0_10 = arith.constant 0 : index
    %11 = vector.load %arg10[%c0_9, %c0_10] : memref<4x128xf32, #tpu.memory_space<vmem>>, vector<4x128xf32>
    %c0_11 = arith.constant 0 : index
    %c0_12 = arith.constant 0 : index
    %12 = vector.load %arg11[%c0_11, %c0_12] : memref<32x384xf32, #tpu.memory_space<vmem>>, vector<4x384xf32>
    %c0_13 = arith.constant 0 : index
    %c0_14 = arith.constant 0 : index
    %13 = vector.load %arg3[%c0_13, %c0_14] : memref<128x256xf32, #tpu.memory_space<vmem>>, vector<128x256xf32>
    %cst_15 = arith.constant dense<0.000000e+00> : vector<4x256xf32>
    %14 = tpu.matmul %11, %13, %cst_15 {dimension_numbers = #tpu.dot_dimension_numbers<[1], [0], [0], [1], [0, 0, 1, 1], [], []>} : vector<4x128xf32>, vector<128x256xf32>, vector<4x256xf32> -> vector<4x256xf32>
    %15 = vector.extract_strided_slice %12 {offsets = [0, 0], sizes = [4, 128], strides = [1, 1]} : vector<4x384xf32> to vector<4x128xf32>
    %16 = vector.extract_strided_slice %14 {offsets = [0, 0], sizes = [4, 128], strides = [1, 1]} : vector<4x256xf32> to vector<4x128xf32>
    %17 = arith.addf %15, %16 : vector<4x128xf32>
    %18 = arith.negf %17 : vector<4x128xf32>
    %19 = math.exp %18 : vector<4x128xf32>
    %cst_16 = arith.constant 1.000000e+00 : f32
    %20 = vector.broadcast %cst_16 : f32 to vector<4x128xf32>
    %21 = arith.addf %20, %19 : vector<4x128xf32>
    %22 = arith.divf %20, %21 : vector<4x128xf32>
    %23 = vector.extract_strided_slice %12 {offsets = [0, 128], sizes = [4, 128], strides = [1, 1]} : vector<4x384xf32> to vector<4x128xf32>
    %24 = vector.extract_strided_slice %14 {offsets = [0, 128], sizes = [4, 128], strides = [1, 1]} : vector<4x256xf32> to vector<4x128xf32>
    %25 = arith.addf %23, %24 : vector<4x128xf32>
    %26 = arith.negf %25 : vector<4x128xf32>
    %27 = math.exp %26 : vector<4x128xf32>
    %cst_17 = arith.constant 1.000000e+00 : f32
    %28 = vector.broadcast %cst_17 : f32 to vector<4x128xf32>
    %29 = arith.addf %28, %27 : vector<4x128xf32>
    %30 = arith.divf %28, %29 : vector<4x128xf32>
    %31 = arith.mulf %30, %11 : vector<4x128xf32>
    %32 = vector.extract_strided_slice %12 {offsets = [0, 256], sizes = [4, 128], strides = [1, 1]} : vector<4x384xf32> to vector<4x128xf32>
    %c0_18 = arith.constant 0 : index
    %c0_19 = arith.constant 0 : index
    %33 = vector.load %arg4[%c0_18, %c0_19] : memref<128x128xf32, #tpu.memory_space<vmem>>, vector<128x128xf32>
    %cst_20 = arith.constant dense<0.000000e+00> : vector<4x128xf32>
    %34 = tpu.matmul %31, %33, %cst_20 {dimension_numbers = #tpu.dot_dimension_numbers<[1], [0], [0], [1], [0, 0, 1, 1], [], []>} : vector<4x128xf32>, vector<128x128xf32>, vector<4x128xf32> -> vector<4x128xf32>
    %35 = arith.addf %32, %34 : vector<4x128xf32>
    %36 = math.tanh %35 : vector<4x128xf32>
    %37 = arith.subf %11, %36 : vector<4x128xf32>
    %38 = arith.mulf %22, %37 : vector<4x128xf32>
    %39 = arith.addf %36, %38 : vector<4x128xf32>
    %c0_21 = arith.constant 0 : index
    %c0_22 = arith.constant 0 : index
    %c0_23 = arith.constant 0 : index
    %40 = vector.load %arg8[%c0_21, %c0_22, %c0_23] : memref<1x32x128xf32, #tpu.memory_space<vmem>>, vector<1x4x128xf32>
    %41 = vector.shape_cast %40 : vector<1x4x128xf32> to vector<4x128xf32>
    %42 = vector.shape_cast %39 : vector<4x128xf32> to vector<1x4x128xf32>
    tpu.vector_store %arg8[%c0_21, %c0_22, %c0_23], %42 {strides = array<i32>} : memref<1x32x128xf32, #tpu.memory_space<vmem>>, vector<1x4x128xf32>,
    %c4 = arith.constant 4 : index
    %c0_24 = arith.constant 0 : index
    %43 = vector.load %arg11[%c4, %c0_24] : memref<32x384xf32, #tpu.memory_space<vmem>>, vector<4x384xf32>
    %c0_25 = arith.constant 0 : index
    %c0_26 = arith.constant 0 : index
    %44 = vector.load %arg3[%c0_25, %c0_26] : memref<128x256xf32, #tpu.memory_space<vmem>>, vector<128x256xf32>
    %cst_27 = arith.constant dense<0.000000e+00> : vector<4x256xf32>
    %45 = tpu.matmul %39, %44, %cst_27 {dimension_numbers = #tpu.dot_dimension_numbers<[1], [0], [0], [1], [0, 0, 1, 1], [], []>} : vector<4x128xf32>, vector<128x256xf32>, vector<4x256xf32> -> vector<4x256xf32>
    %46 = vector.extract_strided_slice %43 {offsets = [0, 0], sizes = [4, 128], strides = [1, 1]} : vector<4x384xf32> to vector<4x128xf32>
    %47 = vector.extract_strided_slice %45 {offsets = [0, 0], sizes = [4, 128], strides = [1, 1]} : vector<4x256xf32> to vector<4x128xf32>
    %48 = arith.addf %46, %47 : vector<4x128xf32>
    %49 = arith.negf %48 : vector<4x128xf32>
    %50 = math.exp %49 : vector<4x128xf32>
    %cst_28 = arith.constant 1.000000e+00 : f32
    %51 = vector.broadcast %cst_28 : f32 to vector<4x128xf32>
    %52 = arith.addf %51, %50 : vector<4x128xf32>
    %53 = arith.divf %51, %52 : vector<4x128xf32>
    %54 = vector.extract_strided_slice %43 {offsets = [0, 128], sizes = [4, 128], strides = [1, 1]} : vector<4x384xf32> to vector<4x128xf32>
    %55 = vector.extract_strided_slice %45 {offsets = [0, 128], sizes = [4, 128], strides = [1, 1]} : vector<4x256xf32> to vector<4x128xf32>
    %56 = arith.addf %54, %55 : vector<4x128xf32>
    %57 = arith.negf %56 : vector<4x128xf32>
    %58 = math.exp %57 : vector<4x128xf32>
    %cst_29 = arith.constant 1.000000e+00 : f32
    %59 = vector.broadcast %cst_29 : f32 to vector<4x128xf32>
    %60 = arith.addf %59, %58 : vector<4x128xf32>
    %61 = arith.divf %59, %60 : vector<4x128xf32>
    %62 = arith.mulf %61, %39 : vector<4x128xf32>
    %63 = vector.extract_strided_slice %43 {offsets = [0, 256], sizes = [4, 128], strides = [1, 1]} : vector<4x384xf32> to vector<4x128xf32>
    %c0_30 = arith.constant 0 : index
    %c0_31 = arith.constant 0 : index
    %64 = vector.load %arg4[%c0_30, %c0_31] : memref<128x128xf32, #tpu.memory_space<vmem>>, vector<128x128xf32>
    %cst_32 = arith.constant dense<0.000000e+00> : vector<4x128xf32>
    %65 = tpu.matmul %62, %64, %cst_32 {dimension_numbers = #tpu.dot_dimension_numbers<[1], [0], [0], [1], [0, 0, 1, 1], [], []>} : vector<4x128xf32>, vector<128x128xf32>, vector<4x128xf32> -> vector<4x128xf32>
    %66 = arith.addf %63, %65 : vector<4x128xf32>
    %67 = math.tanh %66 : vector<4x128xf32>
    %68 = arith.subf %39, %67 : vector<4x128xf32>
    %69 = arith.mulf %53, %68 : vector<4x128xf32>
    %70 = arith.addf %67, %69 : vector<4x128xf32>
    %c0_33 = arith.constant 0 : index
    %c4_34 = arith.constant 4 : index
    %c0_35 = arith.constant 0 : index
    %71 = vector.load %arg8[%c0_33, %c4_34, %c0_35] : memref<1x32x128xf32, #tpu.memory_space<vmem>>, vector<1x4x128xf32>
    %72 = vector.shape_cast %71 : vector<1x4x128xf32> to vector<4x128xf32>
    %73 = vector.shape_cast %70 : vector<4x128xf32> to vector<1x4x128xf32>
    tpu.vector_store %arg8[%c0_33, %c4_34, %c0_35], %73 {strides = array<i32>} : memref<1x32x128xf32, #tpu.memory_space<vmem>>, vector<1x4x128xf32>,
    %c8 = arith.constant 8 : index
    %c0_36 = arith.constant 0 : index
    %74 = vector.load %arg11[%c8, %c0_36] : memref<32x384xf32, #tpu.memory_space<vmem>>, vector<4x384xf32>
    %c0_37 = arith.constant 0 : index
    %c0_38 = arith.constant 0 : index
    %75 = vector.load %arg3[%c0_37, %c0_38] : memref<128x256xf32, #tpu.memory_space<vmem>>, vector<128x256xf32>
    %cst_39 = arith.constant dense<0.000000e+00> : vector<4x256xf32>
    %76 = tpu.matmul %70, %75, %cst_39 {dimension_numbers = #tpu.dot_dimension_numbers<[1], [0], [0], [1], [0, 0, 1, 1], [], []>} : vector<4x128xf32>, vector<128x256xf32>, vector<4x256xf32> -> vector<4x256xf32>
    %77 = vector.extract_strided_slice %74 {offsets = [0, 0], sizes = [4, 128], strides = [1, 1]} : vector<4x384xf32> to vector<4x128xf32>
    %78 = vector.extract_strided_slice %76 {offsets = [0, 0], sizes = [4, 128], strides = [1, 1]} : vector<4x256xf32> to vector<4x128xf32>
    %79 = arith.addf %77, %78 : vector<4x128xf32>
    %80 = arith.negf %79 : vector<4x128xf32>
    %81 = math.exp %80 : vector<4x128xf32>
    %cst_40 = arith.constant 1.000000e+00 : f32
    %82 = vector.broadcast %cst_40 : f32 to vector<4x128xf32>
    %83 = arith.addf %82, %81 : vector<4x128xf32>
    %84 = arith.divf %82, %83 : vector<4x128xf32>
    %85 = vector.extract_strided_slice %74 {offsets = [0, 128], sizes = [4, 128], strides = [1, 1]} : vector<4x384xf32> to vector<4x128xf32>
    %86 = vector.extract_strided_slice %76 {offsets = [0, 128], sizes = [4, 128], strides = [1, 1]} : vector<4x256xf32> to vector<4x128xf32>
    %87 = arith.addf %85, %86 : vector<4x128xf32>
    %88 = arith.negf %87 : vector<4x128xf32>
    %89 = math.exp %88 : vector<4x128xf32>
    %cst_41 = arith.constant 1.000000e+00 : f32
    %90 = vector.broadcast %cst_41 : f32 to vector<4x128xf32>
    %91 = arith.addf %90, %89 : vector<4x128xf32>
    %92 = arith.divf %90, %91 : vector<4x128xf32>
    %93 = arith.mulf %92, %70 : vector<4x128xf32>
    %94 = vector.extract_strided_slice %74 {offsets = [0, 256], sizes = [4, 128], strides = [1, 1]} : vector<4x384xf32> to vector<4x128xf32>
    %c0_42 = arith.constant 0 : index
    %c0_43 = arith.constant 0 : index
    %95 = vector.load %arg4[%c0_42, %c0_43] : memref<128x128xf32, #tpu.memory_space<vmem>>, vector<128x128xf32>
    %cst_44 = arith.constant dense<0.000000e+00> : vector<4x128xf32>
    %96 = tpu.matmul %93, %95, %cst_44 {dimension_numbers = #tpu.dot_dimension_numbers<[1], [0], [0], [1], [0, 0, 1, 1], [], []>} : vector<4x128xf32>, vector<128x128xf32>, vector<4x128xf32> -> vector<4x128xf32>
    %97 = arith.addf %94, %96 : vector<4x128xf32>
    %98 = math.tanh %97 : vector<4x128xf32>
    %99 = arith.subf %70, %98 : vector<4x128xf32>
    %100 = arith.mulf %84, %99 : vector<4x128xf32>
    %101 = arith.addf %98, %100 : vector<4x128xf32>
    %c0_45 = arith.constant 0 : index
    %c8_46 = arith.constant 8 : index
    %c0_47 = arith.constant 0 : index
    %102 = vector.load %arg8[%c0_45, %c8_46, %c0_47] : memref<1x32x128xf32, #tpu.memory_space<vmem>>, vector<1x4x128xf32>
    %103 = vector.shape_cast %102 : vector<1x4x128xf32> to vector<4x128xf32>
    %104 = vector.shape_cast %101 : vector<4x128xf32> to vector<1x4x128xf32>
    tpu.vector_store %arg8[%c0_45, %c8_46, %c0_47], %104 {strides = array<i32>} : memref<1x32x128xf32, #tpu.memory_space<vmem>>, vector<1x4x128xf32>,
    %c12 = arith.constant 12 : index
    %c0_48 = arith.constant 0 : index
    %105 = vector.load %arg11[%c12, %c0_48] : memref<32x384xf32, #tpu.memory_space<vmem>>, vector<4x384xf32>
    %c0_49 = arith.constant 0 : index
    %c0_50 = arith.constant 0 : index
    %106 = vector.load %arg3[%c0_49, %c0_50] : memref<128x256xf32, #tpu.memory_space<vmem>>, vector<128x256xf32>
    %cst_51 = arith.constant dense<0.000000e+00> : vector<4x256xf32>
    %107 = tpu.matmul %101, %106, %cst_51 {dimension_numbers = #tpu.dot_dimension_numbers<[1], [0], [0], [1], [0, 0, 1, 1], [], []>} : vector<4x128xf32>, vector<128x256xf32>, vector<4x256xf32> -> vector<4x256xf32>
    %108 = vector.extract_strided_slice %105 {offsets = [0, 0], sizes = [4, 128], strides = [1, 1]} : vector<4x384xf32> to vector<4x128xf32>
    %109 = vector.extract_strided_slice %107 {offsets = [0, 0], sizes = [4, 128], strides = [1, 1]} : vector<4x256xf32> to vector<4x128xf32>
    %110 = arith.addf %108, %109 : vector<4x128xf32>
    %111 = arith.negf %110 : vector<4x128xf32>
    %112 = math.exp %111 : vector<4x128xf32>
    %cst_52 = arith.constant 1.000000e+00 : f32
    %113 = vector.broadcast %cst_52 : f32 to vector<4x128xf32>
    %114 = arith.addf %113, %112 : vector<4x128xf32>
    %115 = arith.divf %113, %114 : vector<4x128xf32>
    %116 = vector.extract_strided_slice %105 {offsets = [0, 128], sizes = [4, 128], strides = [1, 1]} : vector<4x384xf32> to vector<4x128xf32>
    %117 = vector.extract_strided_slice %107 {offsets = [0, 128], sizes = [4, 128], strides = [1, 1]} : vector<4x256xf32> to vector<4x128xf32>
    %118 = arith.addf %116, %117 : vector<4x128xf32>
    %119 = arith.negf %118 : vector<4x128xf32>
    %120 = math.exp %119 : vector<4x128xf32>
    %cst_53 = arith.constant 1.000000e+00 : f32
    %121 = vector.broadcast %cst_53 : f32 to vector<4x128xf32>
    %122 = arith.addf %121, %120 : vector<4x128xf32>
    %123 = arith.divf %121, %122 : vector<4x128xf32>
    %124 = arith.mulf %123, %101 : vector<4x128xf32>
    %125 = vector.extract_strided_slice %105 {offsets = [0, 256], sizes = [4, 128], strides = [1, 1]} : vector<4x384xf32> to vector<4x128xf32>
    %c0_54 = arith.constant 0 : index
    %c0_55 = arith.constant 0 : index
    %126 = vector.load %arg4[%c0_54, %c0_55] : memref<128x128xf32, #tpu.memory_space<vmem>>, vector<128x128xf32>
    %cst_56 = arith.constant dense<0.000000e+00> : vector<4x128xf32>
    %127 = tpu.matmul %124, %126, %cst_56 {dimension_numbers = #tpu.dot_dimension_numbers<[1], [0], [0], [1], [0, 0, 1, 1], [], []>} : vector<4x128xf32>, vector<128x128xf32>, vector<4x128xf32> -> vector<4x128xf32>
    %128 = arith.addf %125, %127 : vector<4x128xf32>
    %129 = math.tanh %128 : vector<4x128xf32>
    %130 = arith.subf %101, %129 : vector<4x128xf32>
    %131 = arith.mulf %115, %130 : vector<4x128xf32>
    %132 = arith.addf %129, %131 : vector<4x128xf32>
    %c0_57 = arith.constant 0 : index
    %c12_58 = arith.constant 12 : index
    %c0_59 = arith.constant 0 : index
    %133 = vector.load %arg8[%c0_57, %c12_58, %c0_59] : memref<1x32x128xf32, #tpu.memory_space<vmem>>, vector<1x4x128xf32>
    %134 = vector.shape_cast %133 : vector<1x4x128xf32> to vector<4x128xf32>
    %135 = vector.shape_cast %132 : vector<4x128xf32> to vector<1x4x128xf32>
    tpu.vector_store %arg8[%c0_57, %c12_58, %c0_59], %135 {strides = array<i32>} : memref<1x32x128xf32, #tpu.memory_space<vmem>>, vector<1x4x128xf32>,
    %c16 = arith.constant 16 : index
    %c0_60 = arith.constant 0 : index
    %136 = vector.load %arg11[%c16, %c0_60] : memref<32x384xf32, #tpu.memory_space<vmem>>, vector<4x384xf32>
    %c0_61 = arith.constant 0 : index
    %c0_62 = arith.constant 0 : index
    %137 = vector.load %arg3[%c0_61, %c0_62] : memref<128x256xf32, #tpu.memory_space<vmem>>, vector<128x256xf32>
    %cst_63 = arith.constant dense<0.000000e+00> : vector<4x256xf32>
    %138 = tpu.matmul %132, %137, %cst_63 {dimension_numbers = #tpu.dot_dimension_numbers<[1], [0], [0], [1], [0, 0, 1, 1], [], []>} : vector<4x128xf32>, vector<128x256xf32>, vector<4x256xf32> -> vector<4x256xf32>
    %139 = vector.extract_strided_slice %136 {offsets = [0, 0], sizes = [4, 128], strides = [1, 1]} : vector<4x384xf32> to vector<4x128xf32>
    %140 = vector.extract_strided_slice %138 {offsets = [0, 0], sizes = [4, 128], strides = [1, 1]} : vector<4x256xf32> to vector<4x128xf32>
    %141 = arith.addf %139, %140 : vector<4x128xf32>
    %142 = arith.negf %141 : vector<4x128xf32>
    %143 = math.exp %142 : vector<4x128xf32>
    %cst_64 = arith.constant 1.000000e+00 : f32
    %144 = vector.broadcast %cst_64 : f32 to vector<4x128xf32>
    %145 = arith.addf %144, %143 : vector<4x128xf32>
    %146 = arith.divf %144, %145 : vector<4x128xf32>
    %147 = vector.extract_strided_slice %136 {offsets = [0, 128], sizes = [4, 128], strides = [1, 1]} : vector<4x384xf32> to vector<4x128xf32>
    %148 = vector.extract_strided_slice %138 {offsets = [0, 128], sizes = [4, 128], strides = [1, 1]} : vector<4x256xf32> to vector<4x128xf32>
    %149 = arith.addf %147, %148 : vector<4x128xf32>
    %150 = arith.negf %149 : vector<4x128xf32>
    %151 = math.exp %150 : vector<4x128xf32>
    %cst_65 = arith.constant 1.000000e+00 : f32
    %152 = vector.broadcast %cst_65 : f32 to vector<4x128xf32>
    %153 = arith.addf %152, %151 : vector<4x128xf32>
    %154 = arith.divf %152, %153 : vector<4x128xf32>
    %155 = arith.mulf %154, %132 : vector<4x128xf32>
    %156 = vector.extract_strided_slice %136 {offsets = [0, 256], sizes = [4, 128], strides = [1, 1]} : vector<4x384xf32> to vector<4x128xf32>
    %c0_66 = arith.constant 0 : index
    %c0_67 = arith.constant 0 : index
    %157 = vector.load %arg4[%c0_66, %c0_67] : memref<128x128xf32, #tpu.memory_space<vmem>>, vector<128x128xf32>
    %cst_68 = arith.constant dense<0.000000e+00> : vector<4x128xf32>
    %158 = tpu.matmul %155, %157, %cst_68 {dimension_numbers = #tpu.dot_dimension_numbers<[1], [0], [0], [1], [0, 0, 1, 1], [], []>} : vector<4x128xf32>, vector<128x128xf32>, vector<4x128xf32> -> vector<4x128xf32>
    %159 = arith.addf %156, %158 : vector<4x128xf32>
    %160 = math.tanh %159 : vector<4x128xf32>
    %161 = arith.subf %132, %160 : vector<4x128xf32>
    %162 = arith.mulf %146, %161 : vector<4x128xf32>
    %163 = arith.addf %160, %162 : vector<4x128xf32>
    %c0_69 = arith.constant 0 : index
    %c16_70 = arith.constant 16 : index
    %c0_71 = arith.constant 0 : index
    %164 = vector.load %arg8[%c0_69, %c16_70, %c0_71] : memref<1x32x128xf32, #tpu.memory_space<vmem>>, vector<1x4x128xf32>
    %165 = vector.shape_cast %164 : vector<1x4x128xf32> to vector<4x128xf32>
    %166 = vector.shape_cast %163 : vector<4x128xf32> to vector<1x4x128xf32>
    tpu.vector_store %arg8[%c0_69, %c16_70, %c0_71], %166 {strides = array<i32>} : memref<1x32x128xf32, #tpu.memory_space<vmem>>, vector<1x4x128xf32>,
    %c20 = arith.constant 20 : index
    %c0_72 = arith.constant 0 : index
    %167 = vector.load %arg11[%c20, %c0_72] : memref<32x384xf32, #tpu.memory_space<vmem>>, vector<4x384xf32>
    %c0_73 = arith.constant 0 : index
    %c0_74 = arith.constant 0 : index
    %168 = vector.load %arg3[%c0_73, %c0_74] : memref<128x256xf32, #tpu.memory_space<vmem>>, vector<128x256xf32>
    %cst_75 = arith.constant dense<0.000000e+00> : vector<4x256xf32>
    %169 = tpu.matmul %163, %168, %cst_75 {dimension_numbers = #tpu.dot_dimension_numbers<[1], [0], [0], [1], [0, 0, 1, 1], [], []>} : vector<4x128xf32>, vector<128x256xf32>, vector<4x256xf32> -> vector<4x256xf32>
    %170 = vector.extract_strided_slice %167 {offsets = [0, 0], sizes = [4, 128], strides = [1, 1]} : vector<4x384xf32> to vector<4x128xf32>
    %171 = vector.extract_strided_slice %169 {offsets = [0, 0], sizes = [4, 128], strides = [1, 1]} : vector<4x256xf32> to vector<4x128xf32>
    %172 = arith.addf %170, %171 : vector<4x128xf32>
    %173 = arith.negf %172 : vector<4x128xf32>
    %174 = math.exp %173 : vector<4x128xf32>
    %cst_76 = arith.constant 1.000000e+00 : f32
    %175 = vector.broadcast %cst_76 : f32 to vector<4x128xf32>
    %176 = arith.addf %175, %174 : vector<4x128xf32>
    %177 = arith.divf %175, %176 : vector<4x128xf32>
    %178 = vector.extract_strided_slice %167 {offsets = [0, 128], sizes = [4, 128], strides = [1, 1]} : vector<4x384xf32> to vector<4x128xf32>
    %179 = vector.extract_strided_slice %169 {offsets = [0, 128], sizes = [4, 128], strides = [1, 1]} : vector<4x256xf32> to vector<4x128xf32>
    %180 = arith.addf %178, %179 : vector<4x128xf32>
    %181 = arith.negf %180 : vector<4x128xf32>
    %182 = math.exp %181 : vector<4x128xf32>
    %cst_77 = arith.constant 1.000000e+00 : f32
    %183 = vector.broadcast %cst_77 : f32 to vector<4x128xf32>
    %184 = arith.addf %183, %182 : vector<4x128xf32>
    %185 = arith.divf %183, %184 : vector<4x128xf32>
    %186 = arith.mulf %185, %163 : vector<4x128xf32>
    %187 = vector.extract_strided_slice %167 {offsets = [0, 256], sizes = [4, 128], strides = [1, 1]} : vector<4x384xf32> to vector<4x128xf32>
    %c0_78 = arith.constant 0 : index
    %c0_79 = arith.constant 0 : index
    %188 = vector.load %arg4[%c0_78, %c0_79] : memref<128x128xf32, #tpu.memory_space<vmem>>, vector<128x128xf32>
    %cst_80 = arith.constant dense<0.000000e+00> : vector<4x128xf32>
    %189 = tpu.matmul %186, %188, %cst_80 {dimension_numbers = #tpu.dot_dimension_numbers<[1], [0], [0], [1], [0, 0, 1, 1], [], []>} : vector<4x128xf32>, vector<128x128xf32>, vector<4x128xf32> -> vector<4x128xf32>
    %190 = arith.addf %187, %189 : vector<4x128xf32>
    %191 = math.tanh %190 : vector<4x128xf32>
    %192 = arith.subf %163, %191 : vector<4x128xf32>
    %193 = arith.mulf %177, %192 : vector<4x128xf32>
    %194 = arith.addf %191, %193 : vector<4x128xf32>
    %c0_81 = arith.constant 0 : index
    %c20_82 = arith.constant 20 : index
    %c0_83 = arith.constant 0 : index
    %195 = vector.load %arg8[%c0_81, %c20_82, %c0_83] : memref<1x32x128xf32, #tpu.memory_space<vmem>>, vector<1x4x128xf32>
    %196 = vector.shape_cast %195 : vector<1x4x128xf32> to vector<4x128xf32>
    %197 = vector.shape_cast %194 : vector<4x128xf32> to vector<1x4x128xf32>
    tpu.vector_store %arg8[%c0_81, %c20_82, %c0_83], %197 {strides = array<i32>} : memref<1x32x128xf32, #tpu.memory_space<vmem>>, vector<1x4x128xf32>,
    %c24 = arith.constant 24 : index
    %c0_84 = arith.constant 0 : index
    %198 = vector.load %arg11[%c24, %c0_84] : memref<32x384xf32, #tpu.memory_space<vmem>>, vector<4x384xf32>
    %c0_85 = arith.constant 0 : index
    %c0_86 = arith.constant 0 : index
    %199 = vector.load %arg3[%c0_85, %c0_86] : memref<128x256xf32, #tpu.memory_space<vmem>>, vector<128x256xf32>
    %cst_87 = arith.constant dense<0.000000e+00> : vector<4x256xf32>
    %200 = tpu.matmul %194, %199, %cst_87 {dimension_numbers = #tpu.dot_dimension_numbers<[1], [0], [0], [1], [0, 0, 1, 1], [], []>} : vector<4x128xf32>, vector<128x256xf32>, vector<4x256xf32> -> vector<4x256xf32>
    %201 = vector.extract_strided_slice %198 {offsets = [0, 0], sizes = [4, 128], strides = [1, 1]} : vector<4x384xf32> to vector<4x128xf32>
    %202 = vector.extract_strided_slice %200 {offsets = [0, 0], sizes = [4, 128], strides = [1, 1]} : vector<4x256xf32> to vector<4x128xf32>
    %203 = arith.addf %201, %202 : vector<4x128xf32>
    %204 = arith.negf %203 : vector<4x128xf32>
    %205 = math.exp %204 : vector<4x128xf32>
    %cst_88 = arith.constant 1.000000e+00 : f32
    %206 = vector.broadcast %cst_88 : f32 to vector<4x128xf32>
    %207 = arith.addf %206, %205 : vector<4x128xf32>
    %208 = arith.divf %206, %207 : vector<4x128xf32>
    %209 = vector.extract_strided_slice %198 {offsets = [0, 128], sizes = [4, 128], strides = [1, 1]} : vector<4x384xf32> to vector<4x128xf32>
    %210 = vector.extract_strided_slice %200 {offsets = [0, 128], sizes = [4, 128], strides = [1, 1]} : vector<4x256xf32> to vector<4x128xf32>
    %211 = arith.addf %209, %210 : vector<4x128xf32>
    %212 = arith.negf %211 : vector<4x128xf32>
    %213 = math.exp %212 : vector<4x128xf32>
    %cst_89 = arith.constant 1.000000e+00 : f32
    %214 = vector.broadcast %cst_89 : f32 to vector<4x128xf32>
    %215 = arith.addf %214, %213 : vector<4x128xf32>
    %216 = arith.divf %214, %215 : vector<4x128xf32>
    %217 = arith.mulf %216, %194 : vector<4x128xf32>
    %218 = vector.extract_strided_slice %198 {offsets = [0, 256], sizes = [4, 128], strides = [1, 1]} : vector<4x384xf32> to vector<4x128xf32>
    %c0_90 = arith.constant 0 : index
    %c0_91 = arith.constant 0 : index
    %219 = vector.load %arg4[%c0_90, %c0_91] : memref<128x128xf32, #tpu.memory_space<vmem>>, vector<128x128xf32>
    %cst_92 = arith.constant dense<0.000000e+00> : vector<4x128xf32>
    %220 = tpu.matmul %217, %219, %cst_92 {dimension_numbers = #tpu.dot_dimension_numbers<[1], [0], [0], [1], [0, 0, 1, 1], [], []>} : vector<4x128xf32>, vector<128x128xf32>, vector<4x128xf32> -> vector<4x128xf32>
    %221 = arith.addf %218, %220 : vector<4x128xf32>
    %222 = math.tanh %221 : vector<4x128xf32>
    %223 = arith.subf %194, %222 : vector<4x128xf32>
    %224 = arith.mulf %208, %223 : vector<4x128xf32>
    %225 = arith.addf %222, %224 : vector<4x128xf32>
    %c0_93 = arith.constant 0 : index
    %c24_94 = arith.constant 24 : index
    %c0_95 = arith.constant 0 : index
    %226 = vector.load %arg8[%c0_93, %c24_94, %c0_95] : memref<1x32x128xf32, #tpu.memory_space<vmem>>, vector<1x4x128xf32>
    %227 = vector.shape_cast %226 : vector<1x4x128xf32> to vector<4x128xf32>
    %228 = vector.shape_cast %225 : vector<4x128xf32> to vector<1x4x128xf32>
    tpu.vector_store %arg8[%c0_93, %c24_94, %c0_95], %228 {strides = array<i32>} : memref<1x32x128xf32, #tpu.memory_space<vmem>>, vector<1x4x128xf32>,
    %c28 = arith.constant 28 : index
    %c0_96 = arith.constant 0 : index
    %229 = vector.load %arg11[%c28, %c0_96] : memref<32x384xf32, #tpu.memory_space<vmem>>, vector<4x384xf32>
    %c0_97 = arith.constant 0 : index
    %c0_98 = arith.constant 0 : index
    %230 = vector.load %arg3[%c0_97, %c0_98] : memref<128x256xf32, #tpu.memory_space<vmem>>, vector<128x256xf32>
    %cst_99 = arith.constant dense<0.000000e+00> : vector<4x256xf32>
    %231 = tpu.matmul %225, %230, %cst_99 {dimension_numbers = #tpu.dot_dimension_numbers<[1], [0], [0], [1], [0, 0, 1, 1], [], []>} : vector<4x128xf32>, vector<128x256xf32>, vector<4x256xf32> -> vector<4x256xf32>
    %232 = vector.extract_strided_slice %229 {offsets = [0, 0], sizes = [4, 128], strides = [1, 1]} : vector<4x384xf32> to vector<4x128xf32>
    %233 = vector.extract_strided_slice %231 {offsets = [0, 0], sizes = [4, 128], strides = [1, 1]} : vector<4x256xf32> to vector<4x128xf32>
    %234 = arith.addf %232, %233 : vector<4x128xf32>
    %235 = arith.negf %234 : vector<4x128xf32>
    %236 = math.exp %235 : vector<4x128xf32>
    %cst_100 = arith.constant 1.000000e+00 : f32
    %237 = vector.broadcast %cst_100 : f32 to vector<4x128xf32>
    %238 = arith.addf %237, %236 : vector<4x128xf32>
    %239 = arith.divf %237, %238 : vector<4x128xf32>
    %240 = vector.extract_strided_slice %229 {offsets = [0, 128], sizes = [4, 128], strides = [1, 1]} : vector<4x384xf32> to vector<4x128xf32>
    %241 = vector.extract_strided_slice %231 {offsets = [0, 128], sizes = [4, 128], strides = [1, 1]} : vector<4x256xf32> to vector<4x128xf32>
    %242 = arith.addf %240, %241 : vector<4x128xf32>
    %243 = arith.negf %242 : vector<4x128xf32>
    %244 = math.exp %243 : vector<4x128xf32>
    %cst_101 = arith.constant 1.000000e+00 : f32
    %245 = vector.broadcast %cst_101 : f32 to vector<4x128xf32>
    %246 = arith.addf %245, %244 : vector<4x128xf32>
    %247 = arith.divf %245, %246 : vector<4x128xf32>
    %248 = arith.mulf %247, %225 : vector<4x128xf32>
    %249 = vector.extract_strided_slice %229 {offsets = [0, 256], sizes = [4, 128], strides = [1, 1]} : vector<4x384xf32> to vector<4x128xf32>
    %c0_102 = arith.constant 0 : index
    %c0_103 = arith.constant 0 : index
    %250 = vector.load %arg4[%c0_102, %c0_103] : memref<128x128xf32, #tpu.memory_space<vmem>>, vector<128x128xf32>
    %cst_104 = arith.constant dense<0.000000e+00> : vector<4x128xf32>
    %251 = tpu.matmul %248, %250, %cst_104 {dimension_numbers = #tpu.dot_dimension_numbers<[1], [0], [0], [1], [0, 0, 1, 1], [], []>} : vector<4x128xf32>, vector<128x128xf32>, vector<4x128xf32> -> vector<4x128xf32>
    %252 = arith.addf %249, %251 : vector<4x128xf32>
    %253 = math.tanh %252 : vector<4x128xf32>
    %254 = arith.subf %225, %253 : vector<4x128xf32>
    %255 = arith.mulf %239, %254 : vector<4x128xf32>
    %256 = arith.addf %253, %255 : vector<4x128xf32>
    %c0_105 = arith.constant 0 : index
    %c28_106 = arith.constant 28 : index
    %c0_107 = arith.constant 0 : index
    %257 = vector.load %arg8[%c0_105, %c28_106, %c0_107] : memref<1x32x128xf32, #tpu.memory_space<vmem>>, vector<1x4x128xf32>
    %258 = vector.shape_cast %257 : vector<1x4x128xf32> to vector<4x128xf32>
    %259 = vector.shape_cast %256 : vector<4x128xf32> to vector<1x4x128xf32>
    tpu.vector_store %arg8[%c0_105, %c28_106, %c0_107], %259 {strides = array<i32>} : memref<1x32x128xf32, #tpu.memory_space<vmem>>, vector<1x4x128xf32>,
    %c0_108 = arith.constant 0 : index
    %c0_109 = arith.constant 0 : index
    %260 = vector.load %arg10[%c0_108, %c0_109] : memref<4x128xf32, #tpu.memory_space<vmem>>, vector<4x128xf32>
    tpu.vector_store %arg10[%c0_108, %c0_109], %256 {strides = array<i32>} : memref<4x128xf32, #tpu.memory_space<vmem>>, vector<4x128xf32>,
    %c0_110 = arith.constant 0 : index
    %c0_111 = arith.constant 0 : index
    %c0_112 = arith.constant 0 : index
    %261 = vector.load %arg8[%c0_110, %c0_111, %c0_112] : memref<1x32x128xf32, #tpu.memory_space<vmem>>, vector<1x32x128xf32>
    %262 = vector.shape_cast %261 : vector<1x32x128xf32> to vector<32x128xf32>
    %cst_113 = arith.constant 0.000000e+00 : f32
    %263 = vector.broadcast %cst_113 : f32 to vector<32x128xf32>
    %264 = arith.maximumf %262, %263 : vector<32x128xf32>
    %c0_114 = arith.constant 0 : index
    %c0_115 = arith.constant 0 : index
    %265 = vector.load %arg6[%c0_114, %c0_115] : memref<128x128xf32, #tpu.memory_space<vmem>>, vector<128x128xf32>
    %cst_116 = arith.constant dense<0.000000e+00> : vector<32x128xf32>
    %266 = tpu.matmul %264, %265, %cst_116 {dimension_numbers = #tpu.dot_dimension_numbers<[1], [0], [0], [1], [0, 0, 1, 1], [], []>} : vector<32x128xf32>, vector<128x128xf32>, vector<32x128xf32> -> vector<32x128xf32>
    %c0_117 = arith.constant 0 : index
    %c0_118 = arith.constant 0 : index
    %267 = vector.load %arg7[%c0_117, %c0_118] : memref<1x128xf32, #tpu.memory_space<vmem>>, vector<1x128xf32>
    %268 = vector.broadcast %267 : vector<1x128xf32> to vector<32x128xf32>
    %269 = arith.addf %266, %268 : vector<32x128xf32>
    %c0_119 = arith.constant 0 : index
    %c0_120 = arith.constant 0 : index
    %c0_121 = arith.constant 0 : index
    %270 = vector.load %arg9[%c0_119, %c0_120, %c0_121] : memref<1x32x128xf32, #tpu.memory_space<vmem>>, vector<1x32x128xf32>
    %271 = vector.shape_cast %270 : vector<1x32x128xf32> to vector<32x128xf32>
    %272 = vector.shape_cast %269 : vector<32x128xf32> to vector<1x32x128xf32>
    tpu.vector_store %arg9[%c0_119, %c0_120, %c0_121], %272 {strides = array<i32>} : memref<1x32x128xf32, #tpu.memory_space<vmem>>, vector<1x32x128xf32>,
    return
  }
  func.func @transform_0(%arg0: i32) -> (i32, i32, i32) {
    %c0_i32 = arith.constant 0 : i32
    %c0_i32_0 = arith.constant 0 : i32
    %c0_i32_1 = arith.constant 0 : i32
    return %arg0, %c0_i32, %c0_i32_0 : i32, i32, i32
  }
  func.func @transform_1(%arg0: i32) -> (i32, i32) {
    %c0_i32 = arith.constant 0 : i32
    %c0_i32_0 = arith.constant 0 : i32
    %c0_i32_1 = arith.constant 0 : i32
    return %c0_i32, %c0_i32_0 : i32, i32
  }
  func.func @transform_2(%arg0: i32) -> (i32, i32) {
    %c0_i32 = arith.constant 0 : i32
    %c0_i32_0 = arith.constant 0 : i32
    %c0_i32_1 = arith.constant 0 : i32
    return %c0_i32, %c0_i32_0 : i32, i32
  }
  func.func @transform_3(%arg0: i32) -> (i32, i32) {
    %c0_i32 = arith.constant 0 : i32
    %c0_i32_0 = arith.constant 0 : i32
    %c0_i32_1 = arith.constant 0 : i32
    return %c0_i32, %c0_i32_0 : i32, i32
  }
  func.func @transform_4(%arg0: i32) -> (i32, i32) {
    %c0_i32 = arith.constant 0 : i32
    %c0_i32_0 = arith.constant 0 : i32
    %c0_i32_1 = arith.constant 0 : i32
    return %c0_i32, %c0_i32_0 : i32, i32
  }
  func.func @transform_5(%arg0: i32) -> (i32, i32) {
    %c0_i32 = arith.constant 0 : i32
    %c0_i32_0 = arith.constant 0 : i32
    %c0_i32_1 = arith.constant 0 : i32
    return %c0_i32, %c0_i32_0 : i32, i32
  }
  func.func @transform_6(%arg0: i32) -> (i32, i32) {
    %c0_i32 = arith.constant 0 : i32
    %c0_i32_0 = arith.constant 0 : i32
    %c0_i32_1 = arith.constant 0 : i32
    return %c0_i32, %c0_i32_0 : i32, i32
  }
  func.func @transform_7(%arg0: i32) -> (i32, i32, i32) {
    %c0_i32 = arith.constant 0 : i32
    %c0_i32_0 = arith.constant 0 : i32
    %c0_i32_1 = arith.constant 0 : i32
    return %arg0, %c0_i32, %c0_i32_0 : i32, i32, i32
  }
  func.func @transform_8(%arg0: i32) -> (i32, i32, i32) {
    %c0_i32 = arith.constant 0 : i32
    %c0_i32_0 = arith.constant 0 : i32
    %c0_i32_1 = arith.constant 0 : i32
    return %arg0, %c0_i32, %c0_i32_0 : i32, i32, i32
  }
}

</mosaic_0001>

<llo_original>
// kernel: tpu_custom_call.1
$region0: #{tpu_custom_call.1}
  #allocation0 [shape = 'u32[]', space=smem, size = 0x4, offset = 0x4, fixed_abs, tag = 'smem constant byte address 0x4 - core index']
  #allocation1 [shape = 'u32[144,128]{1,0:T(1,128)}', space=vmem, size = 0x12000, scoped, tag = 'internal scratch']
  #allocation2 [shape = 'f32[4,128]{1,0:T(4,128)}', space=vmem, size = 0x800, scoped, tag = 'scratch operand']
  #allocation3 [shape = 'f32[32,384]{1,0:T(8,128)}', space=vmem, size = 0xc000, scoped, tag = 'scratch operand']
  %s0 = inlined_call_operand.vmem [shape: f32[1,32,16], index: 0, kind: input, shape index: {}]
  %s1 = inlined_call_operand.vmem [shape: f32[16,384], index: 1, kind: input, shape index: {}]
  %s2 = inlined_call_operand.hbm [shape: f32[128,256], index: 2, kind: input, shape index: {}]
  %s3 = inlined_call_operand.hbm [shape: f32[128,128], index: 3, kind: input, shape index: {}]
  %s4 = inlined_call_operand.vmem [shape: f32[1,384], index: 4, kind: input, shape index: {}]
  %s5 = inlined_call_operand.hbm [shape: f32[128,128], index: 5, kind: input, shape index: {}]
  %s6 = inlined_call_operand.vmem [shape: f32[1,128], index: 6, kind: input, shape index: {}]
  %s7 = inlined_call_operand.hbm [shape: f32[1,32,128], index: 7, kind: output, shape index: {0}]
  %s8 = inlined_call_operand.hbm [shape: f32[1,32,128], index: 8, kind: output, shape index: {1}]
  %9 = xla_tuple %s7, %s8
  %s10 = sld [smem:[#allocation0]]
  $region62: #{tpu_custom_call.1} parent=0
    _
  %s12 = ssub.s32 1, %s10
  %s13 = scalar_select 0, %s12, %s10
  $region1: #{tpu_custom_call.1} parent=0
    #allocation4 [shape = 'u8[131072]{0}', space=vmem, size = 0x20000, scoped, tag = 'input window, operand 2, single buffered']
    #allocation5 [shape = 's32[1]{0}', space=sflag, size = 0x4, scoped, tag = 'scoped memory for tpu_custom_call.1']
    #allocation6 [shape = 's32[1]{0}', space=sflag, size = 0x4, scoped, tag = 'scoped memory for tpu_custom_call.1']
    #allocation7 [shape = 'u8[65536]{0}', space=vmem, size = 0x10000, scoped, tag = 'input window, operand 3, single buffered']
    #allocation8 [shape = 's32[1]{0}', space=sflag, size = 0x4, scoped, tag = 'scoped memory for tpu_custom_call.1']
    #allocation9 [shape = 'u8[65536]{0}', space=vmem, size = 0x10000, scoped, tag = 'input window, operand 5, single buffered']
    #allocation10 [shape = 'u8[16384]{0}', space=vmem, size = 0x4000, scoped, tag = 'output window, operand 0, single buffered']
    #allocation11 [shape = 'u8[16384]{0}', space=vmem, size = 0x4000, scoped, tag = 'output window, operand 1, single buffered']
    #allocation12 [shape = 's32[1]{0}', space=sflag, size = 0x4, scoped, tag = 'scoped memory for tpu_custom_call.1']
    %14 = vsyncpa [#allocation5], 0
    %15 = vsyncpa [#allocation8], 0
    %16 = vsyncpa [#allocation6], 0
    %17 = vsyncpa [#allocation12], 0
    // Predicated region
    $region2: #{tpu_custom_call.1} parent=1 // pred_check
      _
    $region3: #{tpu_custom_call.1} parent=1 // pred_check_branch
      %19 = sbr.rel (0) target = $region5
    $region4: #{tpu_custom_call.1} parent=1 // pred_region
      _
    $region5: #{tpu_custom_call.1} parent=1 // pred_fallthru
      _
    // Predicated region
    $region6: #{tpu_custom_call.1} parent=1 // pred_check
      _
    $region7: #{tpu_custom_call.1} parent=1 // pred_check_branch
      %21 = sbr.rel (0) target = $region9
    $region8: #{tpu_custom_call.1} parent=1 // pred_region
      _
    $region9: #{tpu_custom_call.1} parent=1 // pred_fallthru
      _
    // Predicated region
    $region10: #{tpu_custom_call.1} parent=1 // pred_check
      _
    $region11: #{tpu_custom_call.1} parent=1 // pred_check_branch
      %23 = sbr.rel (0) target = $region13
    $region12: #{tpu_custom_call.1} parent=1 // pred_region
      %s25 = ssub.s32 4096, 4096
      %26 = vsyncadd [#allocation5], %s25
      %s27 = sshll.u32 [#allocation4], 4
      %s28 = int_to_ptr.vmem [resolvable:$true] %s27
      %33 = dma.hbm_to_vmem [thread:$0]  %s2, 4096, %s28, [#allocation5], 256, 256, 16
    $region13: #{tpu_custom_call.1} parent=1 // pred_fallthru
      _
    // Predicated region
    $region14: #{tpu_custom_call.1} parent=1 // pred_check
      _
    $region15: #{tpu_custom_call.1} parent=1 // pred_check_branch
      %35 = sbr.rel (0) target = $region17
    $region16: #{tpu_custom_call.1} parent=1 // pred_region
      %s37 = ssub.s32 2048, 2048
      %38 = vsyncadd [#allocation8], %s37
      %s39 = sshll.u32 [#allocation7], 4
      %s40 = int_to_ptr.vmem [resolvable:$true] %s39
      %45 = dma.hbm_to_vmem [thread:$0]  %s3, 2048, %s40, [#allocation8], 128, 128, 8
    $region17: #{tpu_custom_call.1} parent=1 // pred_fallthru
      _
    // Predicated region
    $region18: #{tpu_custom_call.1} parent=1 // pred_check
      _
    $region19: #{tpu_custom_call.1} parent=1 // pred_check_branch
      %47 = sbr.rel (0) target = $region21
    $region20: #{tpu_custom_call.1} parent=1 // pred_region
      _
    $region21: #{tpu_custom_call.1} parent=1 // pred_fallthru
      _
    // Predicated region
    $region22: #{tpu_custom_call.1} parent=1 // pred_check
      _
    $region23: #{tpu_custom_call.1} parent=1 // pred_check_branch
      %49 = sbr.rel (0) target = $region25
    $region24: #{tpu_custom_call.1} parent=1 // pred_region
      %s51 = ssub.s32 2048, 2048
      %52 = vsyncadd [#allocation8], %s51
      %s53 = sshll.u32 [#allocation9], 4
      %s54 = int_to_ptr.vmem [resolvable:$true] %s53
      %59 = dma.hbm_to_vmem [thread:$0]  %s5, 2048, %s54, [#allocation8], 128, 128, 8
    $region25: #{tpu_custom_call.1} parent=1 // pred_fallthru
      _
    // Predicated region
    $region26: #{tpu_custom_call.1} parent=1 // pred_check
      _
    $region27: #{tpu_custom_call.1} parent=1 // pred_check_branch
      %61 = sbr.rel (0) target = $region29
    $region28: #{tpu_custom_call.1} parent=1 // pred_region
      _
    $region29: #{tpu_custom_call.1} parent=1 // pred_fallthru
      _
    // Predicated region
    $region30: #{tpu_custom_call.1} parent=1 // pred_check
      _
    $region31: #{tpu_custom_call.1} parent=1 // pred_check_branch
      %63 = sbr.rel (0) target = $region33
    $region32: #{tpu_custom_call.1} parent=1 // pred_region
      %64 = dma.done [#allocation5], 4096
    $region33: #{tpu_custom_call.1} parent=1 // pred_fallthru
      _
    // Predicated region
    $region34: #{tpu_custom_call.1} parent=1 // pred_check
      _
    $region35: #{tpu_custom_call.1} parent=1 // pred_check_branch
      %66 = sbr.rel (0) target = $region37
    $region36: #{tpu_custom_call.1} parent=1 // pred_region
      %67 = dma.done [#allocation8], 2048
    $region37: #{tpu_custom_call.1} parent=1 // pred_fallthru
      _
    // Predicated region
    $region38: #{tpu_custom_call.1} parent=1 // pred_check
      _
    $region39: #{tpu_custom_call.1} parent=1 // pred_check_branch
      %69 = sbr.rel (0) target = $region41
    $region40: #{tpu_custom_call.1} parent=1 // pred_region
      %70 = dma.done [#allocation8], 2048
    $region41: #{tpu_custom_call.1} parent=1 // pred_fallthru
      _
    %p71 = scmp.eq.s32.totalorder 0, 0
    // Predicated region
    $region42: #{tpu_custom_call.1} parent=1 // pred_check
      %p72 = pneg %p71
    $region43: #{tpu_custom_call.1} parent=1 // pred_check_branch
      %74 = sbr.rel (%p72) target = $region45
    $region44: #{tpu_custom_call.1} parent=1 // pred_region
      %75 = vst [vmem:[#allocation2] sm:$0xf] 0.0
    $region45: #{tpu_custom_call.1} parent=1 // pred_fallthru
      _
    %v76 = vld [vmem:[%s0] sm:$0xff]
    %v77 = vld [vmem:[%s0 + $0x8] sm:$0xff]
    %v78 = vld [vmem:[%s0 + $0x10] sm:$0xff]
    %v79 = vld [vmem:[%s0 + $0x18] sm:$0xff]
    %v80 = vld [vmem:[%s1] sm:$0xff]
    %v81 = vld [vmem:[%s1 + $0x8] sm:$0xff]
    %v82 = vld [vmem:[%s1 + $0x10] sm:$0xff]
    %v83 = vld [vmem:[%s1 + $0x18] sm:$0xff]
    %v84 = vld [vmem:[%s1 + $0x20] sm:$0xff]
    %v85 = vld [vmem:[%s1 + $0x28] sm:$0xff]
    %v86 = vld [vmem:[%s4] sm:$0x7]
    %v88 = vlaneseq
    %v89 = vshrl.u32 %v88, 7
    %v90 = vsub.s32 0, %v89
    %v91 = vrot.slane %v86, %v90
    %v92 = vlaneseq
    %v93 = vshrl.u32 %v92, 7
    %v94 = vsub.s32 1, %v93
    %v95 = vrot.slane %v86, %v94
    %v96 = vlaneseq
    %v97 = vshrl.u32 %v96, 7
    %v98 = vsub.s32 2, %v97
    %v99 = vrot.slane %v86, %v98
    %vm103 = vcmask 130048
    %v105 = vsel %vm103, %v76, 0
    %v108 = vsel %vm103, %v77, 0
    %v111 = vsel %vm103, %v78, 0
    %v114 = vsel %vm103, %v79, 0
    %116 = vmatprep.subr.mxu0 %v81
    %117 = vmatpush1.msra.mxu0 %v80
    %118 = vmatprep.subr.mxu0 %v84
    %119 = vmatpush1.msra.mxu0 %v83
    %120 = vmatprep.subr.mxu0 0.0
    %121 = vmatpush1.msra.mxu0 0.0
    %122 = vmatprep.subr.mxu0 0.0
    %123 = vmatpush1.msra.mxu0 0.0
    %124 = vmatprep.subr.mxu0 0.0
    %125 = vmatpush1.msra.mxu0 0.0
    %126 = vmatprep.subr.mxu0 0.0
    %127 = vmatpush1.msra.mxu0 0.0
    %128 = vmatprep.subr.mxu0 0.0
    %129 = vmatpush1.msra.mxu0 0.0
    %130 = vmatprep.subr.mxu0 0.0
    %131 = vmatpush1.msra.mxu0 0.0
    %132 = vmatprep.subr.mxu0 0.0
    %133 = vmatpush1.msra.mxu0 0.0
    %134 = vmatprep.subr.mxu0 0.0
    %135 = vmatpush1.msra.mxu0 0.0
    %136 = vmatprep.subr.mxu0 0.0
    %137 = vmatpush1.msra.mxu0 0.0
    %138 = vmatprep.subr.mxu0 0.0
    %139 = vmatpush1.msra.mxu0 0.0
    %140 = vmatprep.subr.mxu0 0.0
    %141 = vmatpush1.msra.mxu0 0.0
    %142 = vmatprep.subr.mxu0 0.0
    %143 = vmatpush1.msra.mxu0 0.0
    %144 = vmatprep.subr.mxu0 0.0
    %145 = vmatpush1.msra.mxu0 0.0
    %146 = vmatprep.subr.mxu0 0.0
    %147 = vmatpush1.msra.mxu0 0.0
    %148 = vmatprep.subr.mxu0 0.0
    %149 = vmatpush1.msra.mxu0 0.0
    %150 = vmatprep.subr.mxu0 0.0
    %151 = vmatpush1.msra.mxu0 0.0
    %152 = vmatprep.subr.mxu0 0.0
    %153 = vmatpush1.msra.mxu0 0.0
    %154 = vmatprep.subr.mxu0 0.0
    %155 = vmatpush1.msra.mxu0 0.0
    %156 = vmatprep.subr.mxu0 0.0
    %157 = vmatpush1.msra.mxu0 0.0
    %158 = vmatprep.subr.mxu0 0.0
    %159 = vmatpush1.msra.mxu0 0.0
    %160 = vmatprep.subr.mxu0 0.0
    %161 = vmatpush1.msra.mxu0 0.0
    %162 = vmatprep.subr.mxu0 0.0
    %163 = vmatpush1.msra.mxu0 0.0
    %164 = vmatprep.subr.mxu0 0.0
    %165 = vmatpush1.msra.mxu0 0.0
    %166 = vmatprep.subr.mxu0 0.0
    %167 = vmatpush1.msra.mxu0 0.0
    %168 = vmatprep.subr.mxu0 0.0
    %169 = vmatpush1.msra.mxu0 0.0
    %170 = vmatprep.subr.mxu0 0.0
    %171 = vmatpush1.msra.mxu0 0.0
    %172 = vmatprep.subr.mxu0 0.0
    %173 = vmatpush1.msra.mxu0 0.0
    %174 = vmatprep.subr.mxu0 0.0
    %175 = vmatpush1.msra.mxu0 0.0
    %176 = vmatprep.subr.mxu0 0.0
    %177 = vmatpush1.msra.mxu0 0.0
    %178 = vmatprep.subr.mxu0 0.0
    %179 = vmatpush1.msra.mxu0 0.0
    %180 = vmatprep.mubr.f32.mxu0 0.0
    %181 = vmatmul.mubr.f32.gmra.mrb[0].mxu0 %v105
    %v182 = vpop.f32.mrb[0].mxu0
    %v183 = vadd.f32 %v91, %v182
    %v184 = vpop.f32.mrb[0].mxu0
    %v185 = vadd.f32 %v95, %v184
    %186 = vmatprep.mubr.f32.mxu0 0.0
    %187 = vmatmul.mubr.f32.gmra.mrb[0].mxu0 %v108
    %v188 = vpop.f32.mrb[0].mxu0
    %v189 = vadd.f32 %v91, %v188
    %v190 = vpop.f32.mrb[0].mxu0
    %v191 = vadd.f32 %v95, %v190
    %192 = vmatprep.mubr.f32.mxu0 0.0
    %193 = vmatmul.mubr.f32.gmra.mrb[0].mxu0 %v111
    %v194 = vpop.f32.mrb[0].mxu0
    %v195 = vadd.f32 %v91, %v194
    %v196 = vpop.f32.mrb[0].mxu0
    %v197 = vadd.f32 %v95, %v196
    %198 = vmatprep.mubr.f32.mxu0 0.0
    %199 = vmatmul.mubr.f32.gmra.mrb[0].mxu0 %v114
    %v200 = vpop.f32.mrb[0].mxu0
    %v201 = vadd.f32 %v91, %v200
    %v202 = vpop.f32.mrb[0].mxu0
    %v203 = vadd.f32 %v95, %v202
    %204 = vdwg.mxu0
    %205 = vmatprep.subr.mxu0 0.0
    %206 = vmatpush1.msra.mxu0 %v82
    %207 = vmatprep.subr.mxu0 0.0
    %208 = vmatpush1.msra.mxu0 %v85
    %209 = vmatprep.subr.mxu0 0.0
    %210 = vmatpush1.msra.mxu0 0.0
    %211 = vmatprep.subr.mxu0 0.0
    %212 = vmatpush1.msra.mxu0 0.0
    %213 = vmatprep.subr.mxu0 0.0
    %214 = vmatpush1.msra.mxu0 0.0
    %215 = vmatprep.subr.mxu0 0.0
    %216 = vmatpush1.msra.mxu0 0.0
    %217 = vmatprep.subr.mxu0 0.0
    %218 = vmatpush1.msra.mxu0 0.0
    %219 = vmatprep.subr.mxu0 0.0
    %220 = vmatpush1.msra.mxu0 0.0
    %221 = vmatprep.subr.mxu0 0.0
    %222 = vmatpush1.msra.mxu0 0.0
    %223 = vmatprep.subr.mxu0 0.0
    %224 = vmatpush1.msra.mxu0 0.0
    %225 = vmatprep.subr.mxu0 0.0
    %226 = vmatpush1.msra.mxu0 0.0
    %227 = vmatprep.subr.mxu0 0.0
    %228 = vmatpush1.msra.mxu0 0.0
    %229 = vmatprep.subr.mxu0 0.0
    %230 = vmatpush1.msra.mxu0 0.0
    %231 = vmatprep.subr.mxu0 0.0
    %232 = vmatpush1.msra.mxu0 0.0
    %233 = vmatprep.subr.mxu0 0.0
    %234 = vmatpush1.msra.mxu0 0.0
    %235 = vmatprep.subr.mxu0 0.0
    %236 = vmatpush1.msra.mxu0 0.0
    %237 = vmatprep.subr.mxu0 0.0
    %238 = vmatpush1.msra.mxu0 0.0
    %239 = vmatprep.subr.mxu0 0.0
    %240 = vmatpush1.msra.mxu0 0.0
    %241 = vmatprep.subr.mxu0 0.0
    %242 = vmatpush1.msra.mxu0 0.0
    %243 = vmatprep.subr.mxu0 0.0
    %244 = vmatpush1.msra.mxu0 0.0
    %245 = vmatprep.subr.mxu0 0.0
    %246 = vmatpush1.msra.mxu0 0.0
    %247 = vmatprep.subr.mxu0 0.0
    %248 = vmatpush1.msra.mxu0 0.0
    %249 = vmatprep.subr.mxu0 0.0
    %250 = vmatpush1.msra.mxu0 0.0
    %251 = vmatprep.subr.mxu0 0.0
    %252 = vmatpush1.msra.mxu0 0.0
    %253 = vmatprep.subr.mxu0 0.0
    %254 = vmatpush1.msra.mxu0 0.0
    %255 = vmatprep.subr.mxu0 0.0
    %256 = vmatpush1.msra.mxu0 0.0
    %257 = vmatprep.subr.mxu0 0.0
    %258 = vmatpush1.msra.mxu0 0.0
    %259 = vmatprep.subr.mxu0 0.0
    %260 = vmatpush1.msra.mxu0 0.0
    %261 = vmatprep.subr.mxu0 0.0
    %262 = vmatpush1.msra.mxu0 0.0
    %263 = vmatprep.subr.mxu0 0.0
    %264 = vmatpush1.msra.mxu0 0.0
    %265 = vmatprep.subr.mxu0 0.0
    %266 = vmatpush1.msra.mxu0 0.0
    %267 = vmatprep.subr.mxu0 0.0
    %268 = vmatpush1.msra.mxu0 0.0
    %269 = vmatprep.mubr.f32.mxu0 0.0
    %270 = vmatmul.mubr.f32.gmra.mrb[0].mxu0 %v105
    %v271 = vpop.f32.mrb[0].mxu0
    %v272 = vadd.f32 %v99, %v271
    %v273 = vpop.f32.mrb[0].mxu0
    %274 = vmatprep.mubr.f32.mxu0 0.0
    %275 = vmatmul.mubr.f32.gmra.mrb[0].mxu0 %v108
    %v276 = vpop.f32.mrb[0].mxu0
    %v277 = vadd.f32 %v99, %v276
    %v278 = vpop.f32.mrb[0].mxu0
    %279 = vmatprep.mubr.f32.mxu0 0.0
    %280 = vmatmul.mubr.f32.gmra.mrb[0].mxu0 %v111
    %v281 = vpop.f32.mrb[0].mxu0
    %v282 = vadd.f32 %v99, %v281
    %v283 = vpop.f32.mrb[0].mxu0
    %284 = vmatprep.mubr.f32.mxu0 0.0
    %285 = vmatmul.mubr.f32.gmra.mrb[0].mxu0 %v114
    %v286 = vpop.f32.mrb[0].mxu0
    %v287 = vadd.f32 %v99, %v286
    %v288 = vpop.f32.mrb[0].mxu0
    %289 = vdwg.mxu0
    %290 = vst [vmem:[#allocation3] sm:$0xff] %v183
    %291 = vst [vmem:[#allocation3 + $0x8] sm:$0xff] %v185
    %292 = vst [vmem:[#allocation3 + $0x10] sm:$0xff] %v272
    %293 = vst [vmem:[#allocation3 + $0x18] sm:$0xff] %v189
    %294 = vst [vmem:[#allocation3 + $0x20] sm:$0xff] %v191
    %295 = vst [vmem:[#allocation3 + $0x28] sm:$0xff] %v277
    %296 = vst [vmem:[#allocation3 + $0x30] sm:$0xff] %v195
    %297 = vst [vmem:[#allocation3 + $0x38] sm:$0xff] %v197
    %298 = vst [vmem:[#allocation3 + $0x40] sm:$0xff] %v282
    %299 = vst [vmem:[#allocation3 + $0x48] sm:$0xff] %v201
    %300 = vst [vmem:[#allocation3 + $0x50] sm:$0xff] %v203
    %301 = vst [vmem:[#allocation3 + $0x58] sm:$0xff] %v287
    %v302 = vld [vmem:[#allocation2] sm:$0xf]
    %v303 = vld [vmem:[#allocation3] sm:$0xf]
    %v304 = vld [vmem:[#allocation3 + $0x8] sm:$0xf]
    %v305 = vld [vmem:[#allocation3 + $0x10] sm:$0xf]
    %v306 = vld [vmem:[#allocation4] sm:$0xff]
    %v307 = vld [vmem:[#allocation4 + $0x8] sm:$0xff]
    %v308 = vld [vmem:[#allocation4 + $0x10] sm:$0xff]
    %v309 = vld [vmem:[#allocation4 + $0x18] sm:$0xff]
    %v310 = vld [vmem:[#allocation4 + $0x20] sm:$0xff]
    %v311 = vld [vmem:[#allocation4 + $0x28] sm:$0xff]
    %v312 = vld [vmem:[#allocation4 + $0x30] sm:$0xff]
    %v313 = vld [vmem:[#allocation4 + $0x38] sm:$0xff]
    %v314 = vld [vmem:[#allocation4 + $0x40] sm:$0xff]
    %v315 = vld [vmem:[#allocation4 + $0x48] sm:$0xff]
    %v316 = vld [vmem:[#allocation4 + $0x50] sm:$0xff]
    %v317 = vld [vmem:[#allocation4 + $0x58] sm:$0xff]
    %v318 = vld [vmem:[#allocation4 + $0x60] sm:$0xff]
    %v319 = vld [vmem:[#allocation4 + $0x68] sm:$0xff]
    %v320 = vld [vmem:[#allocation4 + $0x70] sm:$0xff]
    %v321 = vld [vmem:[#allocation4 + $0x78] sm:$0xff]
    %v322 = vld [vmem:[#allocation4 + $0x80] sm:$0xff]
    %v323 = vld [vmem:[#allocation4 + $0x88] sm:$0xff]
    %v324 = vld [vmem:[#allocation4 + $0x90] sm:$0xff]
    %v325 = vld [vmem:[#allocation4 + $0x98] sm:$0xff]
    %v326 = vld [vmem:[#allocation4 + $0xa0] sm:$0xff]
    %v327 = vld [vmem:[#allocation4 + $0xa8] sm:$0xff]
    %v328 = vld [vmem:[#allocation4 + $0xb0] sm:$0xff]
    %v329 = vld [vmem:[#allocation4 + $0xb8] sm:$0xff]
    %v330 = vld [vmem:[#allocation4 + $0xc0] sm:$0xff]
    %v331 = vld [vmem:[#allocation4 + $0xc8] sm:$0xff]
    %v332 = vld [vmem:[#allocation4 + $0xd0] sm:$0xff]
    %v333 = vld [vmem:[#allocation4 + $0xd8] sm:$0xff]
    %v334 = vld [vmem:[#allocation4 + $0xe0] sm:$0xff]
    %v335 = vld [vmem:[#allocation4 + $0xe8] sm:$0xff]
    %v336 = vld [vmem:[#allocation4 + $0xf0] sm:$0xff]
    %v337 = vld [vmem:[#allocation4 + $0xf8] sm:$0xff]
    %338 = vmatprep.subr.mxu0 %v307
    %339 = vmatpush1.msra.mxu0 %v306
    %340 = vmatprep.subr.mxu0 %v309
    %341 = vmatpush1.msra.mxu0 %v308
    %342 = vmatprep.subr.mxu0 %v311
    %343 = vmatpush1.msra.mxu0 %v310
    %344 = vmatprep.subr.mxu0 %v313
    %345 = vmatpush1.msra.mxu0 %v312
    %346 = vmatprep.subr.mxu0 %v315
    %347 = vmatpush1.msra.mxu0 %v314
    %348 = vmatprep.subr.mxu0 %v317
    %349 = vmatpush1.msra.mxu0 %v316
    %350 = vmatprep.subr.mxu0 %v319
    %351 = vmatpush1.msra.mxu0 %v318
    %352 = vmatprep.subr.mxu0 %v321
    %353 = vmatpush1.msra.mxu0 %v320
    %354 = vmatprep.subr.mxu0 %v323
    %355 = vmatpush1.msra.mxu0 %v322
    %356 = vmatprep.subr.mxu0 %v325
    %357 = vmatpush1.msra.mxu0 %v324
    %358 = vmatprep.subr.mxu0 %v327
    %359 = vmatpush1.msra.mxu0 %v326
    %360 = vmatprep.subr.mxu0 %v329
    %361 = vmatpush1.msra.mxu0 %v328
    %362 = vmatprep.subr.mxu0 %v331
    %363 = vmatpush1.msra.mxu0 %v330
    %364 = vmatprep.subr.mxu0 %v333
    %365 = vmatpush1.msra.mxu0 %v332
    %366 = vmatprep.subr.mxu0 %v335
    %367 = vmatpush1.msra.mxu0 %v334
    %368 = vmatprep.subr.mxu0 %v337
    %369 = vmatpush1.msra.mxu0 %v336
    %370 = vmatprep.subr.mxu0 0.0
    %371 = vmatpush1.msra.mxu0 0.0
    %372 = vmatprep.subr.mxu0 0.0
    %373 = vmatpush1.msra.mxu0 0.0
    %374 = vmatprep.subr.mxu0 0.0
    %375 = vmatpush1.msra.mxu0 0.0
    %376 = vmatprep.subr.mxu0 0.0
    %377 = vmatpush1.msra.mxu0 0.0
    %378 = vmatprep.subr.mxu0 0.0
    %379 = vmatpush1.msra.mxu0 0.0
    %380 = vmatprep.subr.mxu0 0.0
    %381 = vmatpush1.msra.mxu0 0.0
    %382 = vmatprep.subr.mxu0 0.0
    %383 = vmatpush1.msra.mxu0 0.0
    %384 = vmatprep.subr.mxu0 0.0
    %385 = vmatpush1.msra.mxu0 0.0
    %386 = vmatprep.subr.mxu0 0.0
    %387 = vmatpush1.msra.mxu0 0.0
    %388 = vmatprep.subr.mxu0 0.0
    %389 = vmatpush1.msra.mxu0 0.0
    %390 = vmatprep.subr.mxu0 0.0
    %391 = vmatpush1.msra.mxu0 0.0
    %392 = vmatprep.subr.mxu0 0.0
    %393 = vmatpush1.msra.mxu0 0.0
    %394 = vmatprep.subr.mxu0 0.0
    %395 = vmatpush1.msra.mxu0 0.0
    %396 = vmatprep.subr.mxu0 0.0
    %397 = vmatpush1.msra.mxu0 0.0
    %398 = vmatprep.subr.mxu0 0.0
    %399 = vmatpush1.msra.mxu0 0.0
    %400 = vmatprep.subr.mxu0 0.0
    %401 = vmatpush1.msra.mxu0 0.0
    %402 = vmatprep.mubr.f32.mxu0 0.0
    %403 = vmatmul.mubr.f32.gmra.mrb[0].mxu0 %v302
    %v404 = vpop.f32.mrb[0].mxu0
    %v405 = vadd.f32 0.0, %v404
    %v406 = vpop.f32.mrb[0].mxu0
    %v407 = vadd.f32 0.0, %v406
    %408 = vdwg.mxu0
    %v409 = vadd.f32 %v303, %v405
    %v410 = vxor.u32 %v409, 2147483648
    %v411 = vmul.f32 %v410, 1.442695
    %v412 = vpow.pop %v411
    %v413 = vadd.f32 %v412, 1.0
    %v414 = vrcp.pop %v413
    %v415 = vmul.f32 1.0, %v414
    %v416 = vadd.f32 %v304, %v407
    %v417 = vxor.u32 %v416, 2147483648
    %v418 = vmul.f32 %v417, 1.442695
    %v419 = vpow.pop %v418
    %v420 = vadd.f32 %v419, 1.0
    %v421 = vrcp.pop %v420
    %v422 = vmul.f32 1.0, %v421
    %v423 = vmul.f32 %v422, %v302
    %v424 = vld [vmem:[#allocation7] sm:$0xff]
    %v425 = vld [vmem:[#allocation7 + $0x8] sm:$0xff]
    %v426 = vld [vmem:[#allocation7 + $0x10] sm:$0xff]
    %v427 = vld [vmem:[#allocation7 + $0x18] sm:$0xff]
    %v428 = vld [vmem:[#allocation7 + $0x20] sm:$0xff]
    %v429 = vld [vmem:[#allocation7 + $0x28] sm:$0xff]
    %v430 = vld [vmem:[#allocation7 + $0x30] sm:$0xff]
    %v431 = vld [vmem:[#allocation7 + $0x38] sm:$0xff]
    %v432 = vld [vmem:[#allocation7 + $0x40] sm:$0xff]
    %v433 = vld [vmem:[#allocation7 + $0x48] sm:$0xff]
    %v434 = vld [vmem:[#allocation7 + $0x50] sm:$0xff]
    %v435 = vld [vmem:[#allocation7 + $0x58] sm:$0xff]
    %v436 = vld [vmem:[#allocation7 + $0x60] sm:$0xff]
    %v437 = vld [vmem:[#allocation7 + $0x68] sm:$0xff]
    %v438 = vld [vmem:[#allocation7 + $0x70] sm:$0xff]
    %v439 = vld [vmem:[#allocation7 + $0x78] sm:$0xff]
    %440 = vmatprep.subr.mxu0 0.0
    %441 = vmatpush1.msra.mxu0 %v424
    %442 = vmatprep.subr.mxu0 0.0
    %443 = vmatpush1.msra.mxu0 %v425
    %444 = vmatprep.subr.mxu0 0.0
    %445 = vmatpush1.msra.mxu0 %v426
    %446 = vmatprep.subr.mxu0 0.0
    %447 = vmatpush1.msra.mxu0 %v427
    %448 = vmatprep.subr.mxu0 0.0
    %449 = vmatpush1.msra.mxu0 %v428
    %450 = vmatprep.subr.mxu0 0.0
    %451 = vmatpush1.msra.mxu0 %v429
    %452 = vmatprep.subr.mxu0 0.0
    %453 = vmatpush1.msra.mxu0 %v430
    %454 = vmatprep.subr.mxu0 0.0
    %455 = vmatpush1.msra.mxu0 %v431
    %456 = vmatprep.subr.mxu0 0.0
    %457 = vmatpush1.msra.mxu0 %v432
    %458 = vmatprep.subr.mxu0 0.0
    %459 = vmatpush1.msra.mxu0 %v433
    %460 = vmatprep.subr.mxu0 0.0
    %461 = vmatpush1.msra.mxu0 %v434
    %462 = vmatprep.subr.mxu0 0.0
    %463 = vmatpush1.msra.mxu0 %v435
    %464 = vmatprep.subr.mxu0 0.0
    %465 = vmatpush1.msra.mxu0 %v436
    %466 = vmatprep.subr.mxu0 0.0
    %467 = vmatpush1.msra.mxu0 %v437
    %468 = vmatprep.subr.mxu0 0.0
    %469 = vmatpush1.msra.mxu0 %v438
    %470 = vmatprep.subr.mxu0 0.0
    %471 = vmatpush1.msra.mxu0 %v439
    %472 = vmatprep.subr.mxu0 0.0
    %473 = vmatpush1.msra.mxu0 0.0
    %474 = vmatprep.subr.mxu0 0.0
    %475 = vmatpush1.msra.mxu0 0.0
    %476 = vmatprep.subr.mxu0 0.0
    %477 = vmatpush1.msra.mxu0 0.0
    %478 = vmatprep.subr.mxu0 0.0
    %479 = vmatpush1.msra.mxu0 0.0
    %480 = vmatprep.subr.mxu0 0.0
    %481 = vmatpush1.msra.mxu0 0.0
    %482 = vmatprep.subr.mxu0 0.0
    %483 = vmatpush1.msra.mxu0 0.0
    %484 = vmatprep.subr.mxu0 0.0
    %485 = vmatpush1.msra.mxu0 0.0
    %486 = vmatprep.subr.mxu0 0.0
    %487 = vmatpush1.msra.mxu0 0.0
    %488 = vmatprep.subr.mxu0 0.0
    %489 = vmatpush1.msra.mxu0 0.0
    %490 = vmatprep.subr.mxu0 0.0
    %491 = vmatpush1.msra.mxu0 0.0
    %492 = vmatprep.subr.mxu0 0.0
    %493 = vmatpush1.msra.mxu0 0.0
    %494 = vmatprep.subr.mxu0 0.0
    %495 = vmatpush1.msra.mxu0 0.0
    %496 = vmatprep.subr.mxu0 0.0
    %497 = vmatpush1.msra.mxu0 0.0
    %498 = vmatprep.subr.mxu0 0.0
    %499 = vmatpush1.msra.mxu0 0.0
    %500 = vmatprep.subr.mxu0 0.0
    %501 = vmatpush1.msra.mxu0 0.0
    %502 = vmatprep.subr.mxu0 0.0
    %503 = vmatpush1.msra.mxu0 0.0
    %504 = vmatprep.mubr.f32.mxu0 0.0
    %505 = vmatmul.mubr.f32.gmra.mrb[0].mxu0 %v423
    %v506 = vpop.f32.mrb[0].mxu0
    %v507 = vadd.f32 0.0, %v506
    %v508 = vpop.f32.mrb[0].mxu0
    %509 = vdwg.mxu0
    %v510 = vadd.f32 %v305, %v507
    %v511 = vtanh.pop %v510
    %v512 = vsub.f32 %v302, %v511
    %v513 = vmul.f32 %v415, %v512
    %v514 = vadd.f32 %v511, %v513
    %515 = vst [vmem:[#allocation10] sm:$0xf] %v514
    %v516 = vld [vmem:[#allocation3] sm:$0xf0]
    %v517 = vld [vmem:[#allocation3 + $0x8] sm:$0xf0]
    %v518 = vld [vmem:[#allocation3 + $0x10] sm:$0xf0]
    %v519 = vld [vmem:[#allocation4] sm:$0xff]
    %v520 = vld [vmem:[#allocation4 + $0x8] sm:$0xff]
    %v521 = vld [vmem:[#allocation4 + $0x10] sm:$0xff]
    %v522 = vld [vmem:[#allocation4 + $0x18] sm:$0xff]
    %v523 = vld [vmem:[#allocation4 + $0x20] sm:$0xff]
    %v524 = vld [vmem:[#allocation4 + $0x28] sm:$0xff]
    %v525 = vld [vmem:[#allocation4 + $0x30] sm:$0xff]
    %v526 = vld [vmem:[#allocation4 + $0x38] sm:$0xff]
    %v527 = vld [vmem:[#allocation4 + $0x40] sm:$0xff]
    %v528 = vld [vmem:[#allocation4 + $0x48] sm:$0xff]
    %v529 = vld [vmem:[#allocation4 + $0x50] sm:$0xff]
    %v530 = vld [vmem:[#allocation4 + $0x58] sm:$0xff]
    %v531 = vld [vmem:[#allocation4 + $0x60] sm:$0xff]
    %v532 = vld [vmem:[#allocation4 + $0x68] sm:$0xff]
    %v533 = vld [vmem:[#allocation4 + $0x70] sm:$0xff]
    %v534 = vld [vmem:[#allocation4 + $0x78] sm:$0xff]
    %v535 = vld [vmem:[#allocation4 + $0x80] sm:$0xff]
    %v536 = vld [vmem:[#allocation4 + $0x88] sm:$0xff]
    %v537 = vld [vmem:[#allocation4 + $0x90] sm:$0xff]
    %v538 = vld [vmem:[#allocation4 + $0x98] sm:$0xff]
    %v539 = vld [vmem:[#allocation4 + $0xa0] sm:$0xff]
    %v540 = vld [vmem:[#allocation4 + $0xa8] sm:$0xff]
    %v541 = vld [vmem:[#allocation4 + $0xb0] sm:$0xff]
    %v542 = vld [vmem:[#allocation4 + $0xb8] sm:$0xff]
    %v543 = vld [vmem:[#allocation4 + $0xc0] sm:$0xff]
    %v544 = vld [vmem:[#allocation4 + $0xc8] sm:$0xff]
    %v545 = vld [vmem:[#allocation4 + $0xd0] sm:$0xff]
    %v546 = vld [vmem:[#allocation4 + $0xd8] sm:$0xff]
    %v547 = vld [vmem:[#allocation4 + $0xe0] sm:$0xff]
    %v548 = vld [vmem:[#allocation4 + $0xe8] sm:$0xff]
    %v549 = vld [vmem:[#allocation4 + $0xf0] sm:$0xff]
    %v550 = vld [vmem:[#allocation4 + $0xf8] sm:$0xff]
    %551 = vmatprep.subr.mxu0 %v520
    %552 = vmatpush1.msra.mxu0 %v519
    %553 = vmatprep.subr.mxu0 %v522
    %554 = vmatpush1.msra.mxu0 %v521
    %555 = vmatprep.subr.mxu0 %v524
    %556 = vmatpush1.msra.mxu0 %v523
    %557 = vmatprep.subr.mxu0 %v526
    %558 = vmatpush1.msra.mxu0 %v525
    %559 = vmatprep.subr.mxu0 %v528
    %560 = vmatpush1.msra.mxu0 %v527
    %561 = vmatprep.subr.mxu0 %v530
    %562 = vmatpush1.msra.mxu0 %v529
    %563 = vmatprep.subr.mxu0 %v532
    %564 = vmatpush1.msra.mxu0 %v531
    %565 = vmatprep.subr.mxu0 %v534
    %566 = vmatpush1.msra.mxu0 %v533
    %567 = vmatprep.subr.mxu0 %v536
    %568 = vmatpush1.msra.mxu0 %v535
    %569 = vmatprep.subr.mxu0 %v538
    %570 = vmatpush1.msra.mxu0 %v537
    %571 = vmatprep.subr.mxu0 %v540
    %572 = vmatpush1.msra.mxu0 %v539
    %573 = vmatprep.subr.mxu0 %v542
    %574 = vmatpush1.msra.mxu0 %v541
    %575 = vmatprep.subr.mxu0 %v544
    %576 = vmatpush1.msra.mxu0 %v543
    %577 = vmatprep.subr.mxu0 %v546
    %578 = vmatpush1.msra.mxu0 %v545
    %579 = vmatprep.subr.mxu0 %v548
    %580 = vmatpush1.msra.mxu0 %v547
    %581 = vmatprep.subr.mxu0 %v550
    %582 = vmatpush1.msra.mxu0 %v549
    %583 = vmatprep.subr.mxu0 0.0
    %584 = vmatpush1.msra.mxu0 0.0
    %585 = vmatprep.subr.mxu0 0.0
    %586 = vmatpush1.msra.mxu0 0.0
    %587 = vmatprep.subr.mxu0 0.0
    %588 = vmatpush1.msra.mxu0 0.0
    %589 = vmatprep.subr.mxu0 0.0
    %590 = vmatpush1.msra.mxu0 0.0
    %591 = vmatprep.subr.mxu0 0.0
    %592 = vmatpush1.msra.mxu0 0.0
    %593 = vmatprep.subr.mxu0 0.0
    %594 = vmatpush1.msra.mxu0 0.0
    %595 = vmatprep.subr.mxu0 0.0
    %596 = vmatpush1.msra.mxu0 0.0
    %597 = vmatprep.subr.mxu0 0.0
    %598 = vmatpush1.msra.mxu0 0.0
    %599 = vmatprep.subr.mxu0 0.0
    %600 = vmatpush1.msra.mxu0 0.0
    %601 = vmatprep.subr.mxu0 0.0
    %602 = vmatpush1.msra.mxu0 0.0
    %603 = vmatprep.subr.mxu0 0.0
    %604 = vmatpush1.msra.mxu0 0.0
    %605 = vmatprep.subr.mxu0 0.0
    %606 = vmatpush1.msra.mxu0 0.0
    %607 = vmatprep.subr.mxu0 0.0
    %608 = vmatpush1.msra.mxu0 0.0
    %609 = vmatprep.subr.mxu0 0.0
    %610 = vmatpush1.msra.mxu0 0.0
    %611 = vmatprep.subr.mxu0 0.0
    %612 = vmatpush1.msra.mxu0 0.0
    %613 = vmatprep.subr.mxu0 0.0
    %614 = vmatpush1.msra.mxu0 0.0
    %615 = vmatprep.mubr.f32.mxu0 0.0
    %616 = vmatmul.mubr.f32.gmra.mrb[0].mxu0 %v514
    %v617 = vpop.f32.mrb[0].mxu0
    %v618 = vadd.f32 0.0, %v617
    %v619 = vpop.f32.mrb[0].mxu0
    %v620 = vadd.f32 0.0, %v619
    %621 = vdwg.mxu0
    %v623 = vrot.slane %v618, 4
    %v625 = vadd.f32 %v516, %v623
    %v626 = vxor.u32 %v625, 2147483648
    %v627 = vmul.f32 %v626, 1.442695
    %v628 = vpow.pop %v627
    %v629 = vadd.f32 %v628, 1.0
    %v630 = vrcp.pop %v629
    %v631 = vmul.f32 1.0, %v630
    %v633 = vrot.slane %v620, 4
    %v635 = vadd.f32 %v517, %v633
    %v636 = vxor.u32 %v635, 2147483648
    %v637 = vmul.f32 %v636, 1.442695
    %v638 = vpow.pop %v637
    %v639 = vadd.f32 %v638, 1.0
    %v640 = vrcp.pop %v639
    %v641 = vmul.f32 1.0, %v640
    %v643 = vrot.slane %v514, 4
    %v645 = vmul.f32 %v641, %v643
    %v646 = vld [vmem:[#allocation7] sm:$0xff]
    %v647 = vld [vmem:[#allocation7 + $0x8] sm:$0xff]
    %v648 = vld [vmem:[#allocation7 + $0x10] sm:$0xff]
    %v649 = vld [vmem:[#allocation7 + $0x18] sm:$0xff]
    %v650 = vld [vmem:[#allocation7 + $0x20] sm:$0xff]
    %v651 = vld [vmem:[#allocation7 + $0x28] sm:$0xff]
    %v652 = vld [vmem:[#allocation7 + $0x30] sm:$0xff]
    %v653 = vld [vmem:[#allocation7 + $0x38] sm:$0xff]
    %v654 = vld [vmem:[#allocation7 + $0x40] sm:$0xff]
    %v655 = vld [vmem:[#allocation7 + $0x48] sm:$0xff]
    %v656 = vld [vmem:[#allocation7 + $0x50] sm:$0xff]
    %v657 = vld [vmem:[#allocation7 + $0x58] sm:$0xff]
    %v658 = vld [vmem:[#allocation7 + $0x60] sm:$0xff]
    %v659 = vld [vmem:[#allocation7 + $0x68] sm:$0xff]
    %v660 = vld [vmem:[#allocation7 + $0x70] sm:$0xff]
    %v661 = vld [vmem:[#allocation7 + $0x78] sm:$0xff]
    %v663 = vrot.slane %v645, 4
    %665 = vmatprep.subr.mxu0 0.0
    %666 = vmatpush1.msra.mxu0 %v646
    %667 = vmatprep.subr.mxu0 0.0
    %668 = vmatpush1.msra.mxu0 %v647
    %669 = vmatprep.subr.mxu0 0.0
    %670 = vmatpush1.msra.mxu0 %v648
    %671 = vmatprep.subr.mxu0 0.0
    %672 = vmatpush1.msra.mxu0 %v649
    %673 = vmatprep.subr.mxu0 0.0
    %674 = vmatpush1.msra.mxu0 %v650
    %675 = vmatprep.subr.mxu0 0.0
    %676 = vmatpush1.msra.mxu0 %v651
    %677 = vmatprep.subr.mxu0 0.0
    %678 = vmatpush1.msra.mxu0 %v652
    %679 = vmatprep.subr.mxu0 0.0
    %680 = vmatpush1.msra.mxu0 %v653
    %681 = vmatprep.subr.mxu0 0.0
    %682 = vmatpush1.msra.mxu0 %v654
    %683 = vmatprep.subr.mxu0 0.0
    %684 = vmatpush1.msra.mxu0 %v655
    %685 = vmatprep.subr.mxu0 0.0
    %686 = vmatpush1.msra.mxu0 %v656
    %687 = vmatprep.subr.mxu0 0.0
    %688 = vmatpush1.msra.mxu0 %v657
    %689 = vmatprep.subr.mxu0 0.0
    %690 = vmatpush1.msra.mxu0 %v658
    %691 = vmatprep.subr.mxu0 0.0
    %692 = vmatpush1.msra.mxu0 %v659
    %693 = vmatprep.subr.mxu0 0.0
    %694 = vmatpush1.msra.mxu0 %v660
    %695 = vmatprep.subr.mxu0 0.0
    %696 = vmatpush1.msra.mxu0 %v661
    %697 = vmatprep.subr.mxu0 0.0
    %698 = vmatpush1.msra.mxu0 0.0
    %699 = vmatprep.subr.mxu0 0.0
    %700 = vmatpush1.msra.mxu0 0.0
    %701 = vmatprep.subr.mxu0 0.0
    %702 = vmatpush1.msra.mxu0 0.0
    %703 = vmatprep.subr.mxu0 0.0
    %704 = vmatpush1.msra.mxu0 0.0
    %705 = vmatprep.subr.mxu0 0.0
    %706 = vmatpush1.msra.mxu0 0.0
    %707 = vmatprep.subr.mxu0 0.0
    %708 = vmatpush1.msra.mxu0 0.0
    %709 = vmatprep.subr.mxu0 0.0
    %710 = vmatpush1.msra.mxu0 0.0
    %711 = vmatprep.subr.mxu0 0.0
    %712 = vmatpush1.msra.mxu0 0.0
    %713 = vmatprep.subr.mxu0 0.0
    %714 = vmatpush1.msra.mxu0 0.0
    %715 = vmatprep.subr.mxu0 0.0
    %716 = vmatpush1.msra.mxu0 0.0
    %717 = vmatprep.subr.mxu0 0.0
    %718 = vmatpush1.msra.mxu0 0.0
    %719 = vmatprep.subr.mxu0 0.0
    %720 = vmatpush1.msra.mxu0 0.0
    %721 = vmatprep.subr.mxu0 0.0
    %722 = vmatpush1.msra.mxu0 0.0
    %723 = vmatprep.subr.mxu0 0.0
    %724 = vmatpush1.msra.mxu0 0.0
    %725 = vmatprep.subr.mxu0 0.0
    %726 = vmatpush1.msra.mxu0 0.0
    %727 = vmatprep.subr.mxu0 0.0
    %728 = vmatpush1.msra.mxu0 0.0
    %729 = vmatprep.mubr.f32.mxu0 0.0
    %730 = vmatmul.mubr.f32.gmra.mrb[0].mxu0 %v663
    %v731 = vpop.f32.mrb[0].mxu0
    %v732 = vadd.f32 0.0, %v731
    %v733 = vpop.f32.mrb[0].mxu0
    %734 = vdwg.mxu0
    %v736 = vrot.slane %v732, 4
    %v738 = vadd.f32 %v518, %v736
    %v739 = vtanh.pop %v738
    %v741 = vrot.slane %v739, 4
    %v743 = vsub.f32 %v514, %v741
    %v745 = vrot.slane %v743, 4
    %v747 = vmul.f32 %v631, %v745
    %v748 = vadd.f32 %v739, %v747
    %749 = vst [vmem:[#allocation10] sm:$0xf0] %v748
    %v750 = vld [vmem:[#allocation3 + $0x18] sm:$0xf]
    %v751 = vld [vmem:[#allocation3 + $0x20] sm:$0xf]
    %v752 = vld [vmem:[#allocation3 + $0x28] sm:$0xf]
    %v753 = vld [vmem:[#allocation4] sm:$0xff]
    %v754 = vld [vmem:[#allocation4 + $0x8] sm:$0xff]
    %v755 = vld [vmem:[#allocation4 + $0x10] sm:$0xff]
    %v756 = vld [vmem:[#allocation4 + $0x18] sm:$0xff]
    %v757 = vld [vmem:[#allocation4 + $0x20] sm:$0xff]
    %v758 = vld [vmem:[#allocation4 + $0x28] sm:$0xff]
    %v759 = vld [vmem:[#allocation4 + $0x30] sm:$0xff]
    %v760 = vld [vmem:[#allocation4 + $0x38] sm:$0xff]
    %v761 = vld [vmem:[#allocation4 + $0x40] sm:$0xff]
    %v762 = vld [vmem:[#allocation4 + $0x48] sm:$0xff]
    %v763 = vld [vmem:[#allocation4 + $0x50] sm:$0xff]
    %v764 = vld [vmem:[#allocation4 + $0x58] sm:$0xff]
    %v765 = vld [vmem:[#allocation4 + $0x60] sm:$0xff]
    %v766 = vld [vmem:[#allocation4 + $0x68] sm:$0xff]
    %v767 = vld [vmem:[#allocation4 + $0x70] sm:$0xff]
    %v768 = vld [vmem:[#allocation4 + $0x78] sm:$0xff]
    %v769 = vld [vmem:[#allocation4 + $0x80] sm:$0xff]
    %v770 = vld [vmem:[#allocation4 + $0x88] sm:$0xff]
    %v771 = vld [vmem:[#allocation4 + $0x90] sm:$0xff]
    %v772 = vld [vmem:[#allocation4 + $0x98] sm:$0xff]
    %v773 = vld [vmem:[#allocation4 + $0xa0] sm:$0xff]
    %v774 = vld [vmem:[#allocation4 + $0xa8] sm:$0xff]
    %v775 = vld [vmem:[#allocation4 + $0xb0] sm:$0xff]
    %v776 = vld [vmem:[#allocation4 + $0xb8] sm:$0xff]
    %v777 = vld [vmem:[#allocation4 + $0xc0] sm:$0xff]
    %v778 = vld [vmem:[#allocation4 + $0xc8] sm:$0xff]
    %v779 = vld [vmem:[#allocation4 + $0xd0] sm:$0xff]
    %v780 = vld [vmem:[#allocation4 + $0xd8] sm:$0xff]
    %v781 = vld [vmem:[#allocation4 + $0xe0] sm:$0xff]
    %v782 = vld [vmem:[#allocation4 + $0xe8] sm:$0xff]
    %v783 = vld [vmem:[#allocation4 + $0xf0] sm:$0xff]
    %v784 = vld [vmem:[#allocation4 + $0xf8] sm:$0xff]
    %v786 = vrot.slane %v748, 4
    %788 = vmatprep.subr.mxu0 %v754
    %789 = vmatpush1.msra.mxu0 %v753
    %790 = vmatprep.subr.mxu0 %v756
    %791 = vmatpush1.msra.mxu0 %v755
    %792 = vmatprep.subr.mxu0 %v758
    %793 = vmatpush1.msra.mxu0 %v757
    %794 = vmatprep.subr.mxu0 %v760
    %795 = vmatpush1.msra.mxu0 %v759
    %796 = vmatprep.subr.mxu0 %v762
    %797 = vmatpush1.msra.mxu0 %v761
    %798 = vmatprep.subr.mxu0 %v764
    %799 = vmatpush1.msra.mxu0 %v763
    %800 = vmatprep.subr.mxu0 %v766
    %801 = vmatpush1.msra.mxu0 %v765
    %802 = vmatprep.subr.mxu0 %v768
    %803 = vmatpush1.msra.mxu0 %v767
    %804 = vmatprep.subr.mxu0 %v770
    %805 = vmatpush1.msra.mxu0 %v769
    %806 = vmatprep.subr.mxu0 %v772
    %807 = vmatpush1.msra.mxu0 %v771
    %808 = vmatprep.subr.mxu0 %v774
    %809 = vmatpush1.msra.mxu0 %v773
    %810 = vmatprep.subr.mxu0 %v776
    %811 = vmatpush1.msra.mxu0 %v775
    %812 = vmatprep.subr.mxu0 %v778
    %813 = vmatpush1.msra.mxu0 %v777
    %814 = vmatprep.subr.mxu0 %v780
    %815 = vmatpush1.msra.mxu0 %v779
    %816 = vmatprep.subr.mxu0 %v782
    %817 = vmatpush1.msra.mxu0 %v781
    %818 = vmatprep.subr.mxu0 %v784
    %819 = vmatpush1.msra.mxu0 %v783
    %820 = vmatprep.subr.mxu0 0.0
    %821 = vmatpush1.msra.mxu0 0.0
    %822 = vmatprep.subr.mxu0 0.0
    %823 = vmatpush1.msra.mxu0 0.0
    %824 = vmatprep.subr.mxu0 0.0
    %825 = vmatpush1.msra.mxu0 0.0
    %826 = vmatprep.subr.mxu0 0.0
    %827 = vmatpush1.msra.mxu0 0.0
    %828 = vmatprep.subr.mxu0 0.0
    %829 = vmatpush1.msra.mxu0 0.0
    %830 = vmatprep.subr.mxu0 0.0
    %831 = vmatpush1.msra.mxu0 0.0
    %832 = vmatprep.subr.mxu0 0.0
    %833 = vmatpush1.msra.mxu0 0.0
    %834 = vmatprep.subr.mxu0 0.0
    %835 = vmatpush1.msra.mxu0 0.0
    %836 = vmatprep.subr.mxu0 0.0
    %837 = vmatpush1.msra.mxu0 0.0
    %838 = vmatprep.subr.mxu0 0.0
    %839 = vmatpush1.msra.mxu0 0.0
    %840 = vmatprep.subr.mxu0 0.0
    %841 = vmatpush1.msra.mxu0 0.0
    %842 = vmatprep.subr.mxu0 0.0
    %843 = vmatpush1.msra.mxu0 0.0
    %844 = vmatprep.subr.mxu0 0.0
    %845 = vmatpush1.msra.mxu0 0.0
    %846 = vmatprep.subr.mxu0 0.0
    %847 = vmatpush1.msra.mxu0 0.0
    %848 = vmatprep.subr.mxu0 0.0
    %849 = vmatpush1.msra.mxu0 0.0
    %850 = vmatprep.subr.mxu0 0.0
    %851 = vmatpush1.msra.mxu0 0.0
    %852 = vmatprep.mubr.f32.mxu0 0.0
    %853 = vmatmul.mubr.f32.gmra.mrb[0].mxu0 %v786
    %v854 = vpop.f32.mrb[0].mxu0
    %v855 = vadd.f32 0.0, %v854
    %v856 = vpop.f32.mrb[0].mxu0
    %v857 = vadd.f32 0.0, %v856
    %858 = vdwg.mxu0
    %v859 = vadd.f32 %v750, %v855
    %v860 = vxor.u32 %v859, 2147483648
    %v861 = vmul.f32 %v860, 1.442695
    %v862 = vpow.pop %v861
    %v863 = vadd.f32 %v862, 1.0
    %v864 = vrcp.pop %v863
    %v865 = vmul.f32 1.0, %v864
    %v866 = vadd.f32 %v751, %v857
    %v867 = vxor.u32 %v866, 2147483648
    %v868 = vmul.f32 %v867, 1.442695
    %v869 = vpow.pop %v868
    %v870 = vadd.f32 %v869, 1.0
    %v871 = vrcp.pop %v870
    %v872 = vmul.f32 1.0, %v871
    %v873 = vmul.f32 %v872, %v786
    %v874 = vld [vmem:[#allocation7] sm:$0xff]
    %v875 = vld [vmem:[#allocation7 + $0x8] sm:$0xff]
    %v876 = vld [vmem:[#allocation7 + $0x10] sm:$0xff]
    %v877 = vld [vmem:[#allocation7 + $0x18] sm:$0xff]
    %v878 = vld [vmem:[#allocation7 + $0x20] sm:$0xff]
    %v879 = vld [vmem:[#allocation7 + $0x28] sm:$0xff]
    %v880 = vld [vmem:[#allocation7 + $0x30] sm:$0xff]
    %v881 = vld [vmem:[#allocation7 + $0x38] sm:$0xff]
    %v882 = vld [vmem:[#allocation7 + $0x40] sm:$0xff]
    %v883 = vld [vmem:[#allocation7 + $0x48] sm:$0xff]
    %v884 = vld [vmem:[#allocation7 + $0x50] sm:$0xff]
    %v885 = vld [vmem:[#allocation7 + $0x58] sm:$0xff]
    %v886 = vld [vmem:[#allocation7 + $0x60] sm:$0xff]
    %v887 = vld [vmem:[#allocation7 + $0x68] sm:$0xff]
    %v888 = vld [vmem:[#allocation7 + $0x70] sm:$0xff]
    %v889 = vld [vmem:[#allocation7 + $0x78] sm:$0xff]
    %890 = vmatprep.subr.mxu0 0.0
    %891 = vmatpush1.msra.mxu0 %v874
    %892 = vmatprep.subr.mxu0 0.0
    %893 = vmatpush1.msra.mxu0 %v875
    %894 = vmatprep.subr.mxu0 0.0
    %895 = vmatpush1.msra.mxu0 %v876
    %896 = vmatprep.subr.mxu0 0.0
    %897 = vmatpush1.msra.mxu0 %v877
    %898 = vmatprep.subr.mxu0 0.0
    %899 = vmatpush1.msra.mxu0 %v878
    %900 = vmatprep.subr.mxu0 0.0
    %901 = vmatpush1.msra.mxu0 %v879
    %902 = vmatprep.subr.mxu0 0.0
    %903 = vmatpush1.msra.mxu0 %v880
    %904 = vmatprep.subr.mxu0 0.0
    %905 = vmatpush1.msra.mxu0 %v881
    %906 = vmatprep.subr.mxu0 0.0
    %907 = vmatpush1.msra.mxu0 %v882
    %908 = vmatprep.subr.mxu0 0.0
    %909 = vmatpush1.msra.mxu0 %v883
    %910 = vmatprep.subr.mxu0 0.0
    %911 = vmatpush1.msra.mxu0 %v884
    %912 = vmatprep.subr.mxu0 0.0
    %913 = vmatpush1.msra.mxu0 %v885
    %914 = vmatprep.subr.mxu0 0.0
    %915 = vmatpush1.msra.mxu0 %v886
    %916 = vmatprep.subr.mxu0 0.0
    %917 = vmatpush1.msra.mxu0 %v887
    %918 = vmatprep.subr.mxu0 0.0
    %919 = vmatpush1.msra.mxu0 %v888
    %920 = vmatprep.subr.mxu0 0.0
    %921 = vmatpush1.msra.mxu0 %v889
    %922 = vmatprep.subr.mxu0 0.0
    %923 = vmatpush1.msra.mxu0 0.0
    %924 = vmatprep.subr.mxu0 0.0
    %925 = vmatpush1.msra.mxu0 0.0
    %926 = vmatprep.subr.mxu0 0.0
    %927 = vmatpush1.msra.mxu0 0.0
    %928 = vmatprep.subr.mxu0 0.0
    %929 = vmatpush1.msra.mxu0 0.0
    %930 = vmatprep.subr.mxu0 0.0
    %931 = vmatpush1.msra.mxu0 0.0
    %932 = vmatprep.subr.mxu0 0.0
    %933 = vmatpush1.msra.mxu0 0.0
    %934 = vmatprep.subr.mxu0 0.0
    %935 = vmatpush1.msra.mxu0 0.0
    %936 = vmatprep.subr.mxu0 0.0
    %937 = vmatpush1.msra.mxu0 0.0
    %938 = vmatprep.subr.mxu0 0.0
    %939 = vmatpush1.msra.mxu0 0.0
    %940 = vmatprep.subr.mxu0 0.0
    %941 = vmatpush1.msra.mxu0 0.0
    %942 = vmatprep.subr.mxu0 0.0
    %943 = vmatpush1.msra.mxu0 0.0
    %944 = vmatprep.subr.mxu0 0.0
    %945 = vmatpush1.msra.mxu0 0.0
    %946 = vmatprep.subr.mxu0 0.0
    %947 = vmatpush1.msra.mxu0 0.0
    %948 = vmatprep.subr.mxu0 0.0
    %949 = vmatpush1.msra.mxu0 0.0
    %950 = vmatprep.subr.mxu0 0.0
    %951 = vmatpush1.msra.mxu0 0.0
    %952 = vmatprep.subr.mxu0 0.0
    %953 = vmatpush1.msra.mxu0 0.0
    %954 = vmatprep.mubr.f32.mxu0 0.0
    %955 = vmatmul.mubr.f32.gmra.mrb[0].mxu0 %v873
    %v956 = vpop.f32.mrb[0].mxu0
    %v957 = vadd.f32 0.0, %v956
    %v958 = vpop.f32.mrb[0].mxu0
    %959 = vdwg.mxu0
    %v960 = vadd.f32 %v752, %v957
    %v961 = vtanh.pop %v960
    %v963 = vrot.slane %v961, 4
    %v965 = vsub.f32 %v748, %v963
    %v967 = vrot.slane %v965, 4
    %v969 = vmul.f32 %v865, %v967
    %v970 = vadd.f32 %v961, %v969
    %971 = vst [vmem:[#allocation10 + $0x8] sm:$0xf] %v970
    %v972 = vld [vmem:[#allocation3 + $0x18] sm:$0xf0]
    %v973 = vld [vmem:[#allocation3 + $0x20] sm:$0xf0]
    %v974 = vld [vmem:[#allocation3 + $0x28] sm:$0xf0]
    %v975 = vld [vmem:[#allocation4] sm:$0xff]
    %v976 = vld [vmem:[#allocation4 + $0x8] sm:$0xff]
    %v977 = vld [vmem:[#allocation4 + $0x10] sm:$0xff]
    %v978 = vld [vmem:[#allocation4 + $0x18] sm:$0xff]
    %v979 = vld [vmem:[#allocation4 + $0x20] sm:$0xff]
    %v980 = vld [vmem:[#allocation4 + $0x28] sm:$0xff]
    %v981 = vld [vmem:[#allocation4 + $0x30] sm:$0xff]
    %v982 = vld [vmem:[#allocation4 + $0x38] sm:$0xff]
    %v983 = vld [vmem:[#allocation4 + $0x40] sm:$0xff]
    %v984 = vld [vmem:[#allocation4 + $0x48] sm:$0xff]
    %v985 = vld [vmem:[#allocation4 + $0x50] sm:$0xff]
    %v986 = vld [vmem:[#allocation4 + $0x58] sm:$0xff]
    %v987 = vld [vmem:[#allocation4 + $0x60] sm:$0xff]
    %v988 = vld [vmem:[#allocation4 + $0x68] sm:$0xff]
    %v989 = vld [vmem:[#allocation4 + $0x70] sm:$0xff]
    %v990 = vld [vmem:[#allocation4 + $0x78] sm:$0xff]
    %v991 = vld [vmem:[#allocation4 + $0x80] sm:$0xff]
    %v992 = vld [vmem:[#allocation4 + $0x88] sm:$0xff]
    %v993 = vld [vmem:[#allocation4 + $0x90] sm:$0xff]
    %v994 = vld [vmem:[#allocation4 + $0x98] sm:$0xff]
    %v995 = vld [vmem:[#allocation4 + $0xa0] sm:$0xff]
    %v996 = vld [vmem:[#allocation4 + $0xa8] sm:$0xff]
    %v997 = vld [vmem:[#allocation4 + $0xb0] sm:$0xff]
    %v998 = vld [vmem:[#allocation4 + $0xb8] sm:$0xff]
    %v999 = vld [vmem:[#allocation4 + $0xc0] sm:$0xff]
    %v1000 = vld [vmem:[#allocation4 + $0xc8] sm:$0xff]
    %v1001 = vld [vmem:[#allocation4 + $0xd0] sm:$0xff]
    %v1002 = vld [vmem:[#allocation4 + $0xd8] sm:$0xff]
    %v1003 = vld [vmem:[#allocation4 + $0xe0] sm:$0xff]
    %v1004 = vld [vmem:[#allocation4 + $0xe8] sm:$0xff]
    %v1005 = vld [vmem:[#allocation4 + $0xf0] sm:$0xff]
    %v1006 = vld [vmem:[#allocation4 + $0xf8] sm:$0xff]
    %1007 = vmatprep.subr.mxu0 %v976
    %1008 = vmatpush1.msra.mxu0 %v975
    %1009 = vmatprep.subr.mxu0 %v978
    %1010 = vmatpush1.msra.mxu0 %v977
    %1011 = vmatprep.subr.mxu0 %v980
    %1012 = vmatpush1.msra.mxu0 %v979
    %1013 = vmatprep.subr.mxu0 %v982
    %1014 = vmatpush1.msra.mxu0 %v981
    %1015 = vmatprep.subr.mxu0 %v984
    %1016 = vmatpush1.msra.mxu0 %v983
    %1017 = vmatprep.subr.mxu0 %v986
    %1018 = vmatpush1.msra.mxu0 %v985
    %1019 = vmatprep.subr.mxu0 %v988
    %1020 = vmatpush1.msra.mxu0 %v987
    %1021 = vmatprep.subr.mxu0 %v990
    %1022 = vmatpush1.msra.mxu0 %v989
    %1023 = vmatprep.subr.mxu0 %v992
    %1024 = vmatpush1.msra.mxu0 %v991
    %1025 = vmatprep.subr.mxu0 %v994
    %1026 = vmatpush1.msra.mxu0 %v993
    %1027 = vmatprep.subr.mxu0 %v996
    %1028 = vmatpush1.msra.mxu0 %v995
    %1029 = vmatprep.subr.mxu0 %v998
    %1030 = vmatpush1.msra.mxu0 %v997
    %1031 = vmatprep.subr.mxu0 %v1000
    %1032 = vmatpush1.msra.mxu0 %v999
    %1033 = vmatprep.subr.mxu0 %v1002
    %1034 = vmatpush1.msra.mxu0 %v1001
    %1035 = vmatprep.subr.mxu0 %v1004
    %1036 = vmatpush1.msra.mxu0 %v1003
    %1037 = vmatprep.subr.mxu0 %v1006
    %1038 = vmatpush1.msra.mxu0 %v1005
    %1039 = vmatprep.subr.mxu0 0.0
    %1040 = vmatpush1.msra.mxu0 0.0
    %1041 = vmatprep.subr.mxu0 0.0
    %1042 = vmatpush1.msra.mxu0 0.0
    %1043 = vmatprep.subr.mxu0 0.0
    %1044 = vmatpush1.msra.mxu0 0.0
    %1045 = vmatprep.subr.mxu0 0.0
    %1046 = vmatpush1.msra.mxu0 0.0
    %1047 = vmatprep.subr.mxu0 0.0
    %1048 = vmatpush1.msra.mxu0 0.0
    %1049 = vmatprep.subr.mxu0 0.0
    %1050 = vmatpush1.msra.mxu0 0.0
    %1051 = vmatprep.subr.mxu0 0.0
    %1052 = vmatpush1.msra.mxu0 0.0
    %1053 = vmatprep.subr.mxu0 0.0
    %1054 = vmatpush1.msra.mxu0 0.0
    %1055 = vmatprep.subr.mxu0 0.0
    %1056 = vmatpush1.msra.mxu0 0.0
    %1057 = vmatprep.subr.mxu0 0.0
    %1058 = vmatpush1.msra.mxu0 0.0
    %1059 = vmatprep.subr.mxu0 0.0
    %1060 = vmatpush1.msra.mxu0 0.0
    %1061 = vmatprep.subr.mxu0 0.0
    %1062 = vmatpush1.msra.mxu0 0.0
    %1063 = vmatprep.subr.mxu0 0.0
    %1064 = vmatpush1.msra.mxu0 0.0
    %1065 = vmatprep.subr.mxu0 0.0
    %1066 = vmatpush1.msra.mxu0 0.0
    %1067 = vmatprep.subr.mxu0 0.0
    %1068 = vmatpush1.msra.mxu0 0.0
    %1069 = vmatprep.subr.mxu0 0.0
    %1070 = vmatpush1.msra.mxu0 0.0
    %1071 = vmatprep.mubr.f32.mxu0 0.0
    %1072 = vmatmul.mubr.f32.gmra.mrb[0].mxu0 %v970
    %v1073 = vpop.f32.mrb[0].mxu0
    %v1074 = vadd.f32 0.0, %v1073
    %v1075 = vpop.f32.mrb[0].mxu0
    %v1076 = vadd.f32 0.0, %v1075
    %1077 = vdwg.mxu0
    %v1079 = vrot.slane %v1074, 4
    %v1081 = vadd.f32 %v972, %v1079
    %v1082 = vxor.u32 %v1081, 2147483648
    %v1083 = vmul.f32 %v1082, 1.442695
    %v1084 = vpow.pop %v1083
    %v1085 = vadd.f32 %v1084, 1.0
    %v1086 = vrcp.pop %v1085
    %v1087 = vmul.f32 1.0, %v1086
    %v1089 = vrot.slane %v1076, 4
    %v1091 = vadd.f32 %v973, %v1089
    %v1092 = vxor.u32 %v1091, 2147483648
    %v1093 = vmul.f32 %v1092, 1.442695
    %v1094 = vpow.pop %v1093
    %v1095 = vadd.f32 %v1094, 1.0
    %v1096 = vrcp.pop %v1095
    %v1097 = vmul.f32 1.0, %v1096
    %v1099 = vrot.slane %v970, 4
    %v1101 = vmul.f32 %v1097, %v1099
    %v1102 = vld [vmem:[#allocation7] sm:$0xff]
    %v1103 = vld [vmem:[#allocation7 + $0x8] sm:$0xff]
    %v1104 = vld [vmem:[#allocation7 + $0x10] sm:$0xff]
    %v1105 = vld [vmem:[#allocation7 + $0x18] sm:$0xff]
    %v1106 = vld [vmem:[#allocation7 + $0x20] sm:$0xff]
    %v1107 = vld [vmem:[#allocation7 + $0x28] sm:$0xff]
    %v1108 = vld [vmem:[#allocation7 + $0x30] sm:$0xff]
    %v1109 = vld [vmem:[#allocation7 + $0x38] sm:$0xff]
    %v1110 = vld [vmem:[#allocation7 + $0x40] sm:$0xff]
    %v1111 = vld [vmem:[#allocation7 + $0x48] sm:$0xff]
    %v1112 = vld [vmem:[#allocation7 + $0x50] sm:$0xff]
    %v1113 = vld [vmem:[#allocation7 + $0x58] sm:$0xff]
    %v1114 = vld [vmem:[#allocation7 + $0x60] sm:$0xff]
    %v1115 = vld [vmem:[#allocation7 + $0x68] sm:$0xff]
    %v1116 = vld [vmem:[#allocation7 + $0x70] sm:$0xff]
    %v1117 = vld [vmem:[#allocation7 + $0x78] sm:$0xff]
    %v1119 = vrot.slane %v1101, 4
    %1121 = vmatprep.subr.mxu0 0.0
    %1122 = vmatpush1.msra.mxu0 %v1102
    %1123 = vmatprep.subr.mxu0 0.0
    %1124 = vmatpush1.msra.mxu0 %v1103
    %1125 = vmatprep.subr.mxu0 0.0
    %1126 = vmatpush1.msra.mxu0 %v1104
    %1127 = vmatprep.subr.mxu0 0.0
    %1128 = vmatpush1.msra.mxu0 %v1105
    %1129 = vmatprep.subr.mxu0 0.0
    %1130 = vmatpush1.msra.mxu0 %v1106
    %1131 = vmatprep.subr.mxu0 0.0
    %1132 = vmatpush1.msra.mxu0 %v1107
    %1133 = vmatprep.subr.mxu0 0.0
    %1134 = vmatpush1.msra.mxu0 %v1108
    %1135 = vmatprep.subr.mxu0 0.0
    %1136 = vmatpush1.msra.mxu0 %v1109
    %1137 = vmatprep.subr.mxu0 0.0
    %1138 = vmatpush1.msra.mxu0 %v1110
    %1139 = vmatprep.subr.mxu0 0.0
    %1140 = vmatpush1.msra.mxu0 %v1111
    %1141 = vmatprep.subr.mxu0 0.0
    %1142 = vmatpush1.msra.mxu0 %v1112
    %1143 = vmatprep.subr.mxu0 0.0
    %1144 = vmatpush1.msra.mxu0 %v1113
    %1145 = vmatprep.subr.mxu0 0.0
    %1146 = vmatpush1.msra.mxu0 %v1114
    %1147 = vmatprep.subr.mxu0 0.0
    %1148 = vmatpush1.msra.mxu0 %v1115
    %1149 = vmatprep.subr.mxu0 0.0
    %1150 = vmatpush1.msra.mxu0 %v1116
    %1151 = vmatprep.subr.mxu0 0.0
    %1152 = vmatpush1.msra.mxu0 %v1117
    %1153 = vmatprep.subr.mxu0 0.0
    %1154 = vmatpush1.msra.mxu0 0.0
    %1155 = vmatprep.subr.mxu0 0.0
    %1156 = vmatpush1.msra.mxu0 0.0
    %1157 = vmatprep.subr.mxu0 0.0
    %1158 = vmatpush1.msra.mxu0 0.0
    %1159 = vmatprep.subr.mxu0 0.0
    %1160 = vmatpush1.msra.mxu0 0.0
    %1161 = vmatprep.subr.mxu0 0.0
    %1162 = vmatpush1.msra.mxu0 0.0
    %1163 = vmatprep.subr.mxu0 0.0
    %1164 = vmatpush1.msra.mxu0 0.0
    %1165 = vmatprep.subr.mxu0 0.0
    %1166 = vmatpush1.msra.mxu0 0.0
    %1167 = vmatprep.subr.mxu0 0.0
    %1168 = vmatpush1.msra.mxu0 0.0
    %1169 = vmatprep.subr.mxu0 0.0
    %1170 = vmatpush1.msra.mxu0 0.0
    %1171 = vmatprep.subr.mxu0 0.0
    %1172 = vmatpush1.msra.mxu0 0.0
    %1173 = vmatprep.subr.mxu0 0.0
    %1174 = vmatpush1.msra.mxu0 0.0
    %1175 = vmatprep.subr.mxu0 0.0
    %1176 = vmatpush1.msra.mxu0 0.0
    %1177 = vmatprep.subr.mxu0 0.0
    %1178 = vmatpush1.msra.mxu0 0.0
    %1179 = vmatprep.subr.mxu0 0.0
    %1180 = vmatpush1.msra.mxu0 0.0
    %1181 = vmatprep.subr.mxu0 0.0
    %1182 = vmatpush1.msra.mxu0 0.0
    %1183 = vmatprep.subr.mxu0 0.0
    %1184 = vmatpush1.msra.mxu0 0.0
    %1185 = vmatprep.mubr.f32.mxu0 0.0
    %1186 = vmatmul.mubr.f32.gmra.mrb[0].mxu0 %v1119
    %v1187 = vpop.f32.mrb[0].mxu0
    %v1188 = vadd.f32 0.0, %v1187
    %v1189 = vpop.f32.mrb[0].mxu0
    %1190 = vdwg.mxu0
    %v1192 = vrot.slane %v1188, 4
    %v1194 = vadd.f32 %v974, %v1192
    %v1195 = vtanh.pop %v1194
    %v1197 = vrot.slane %v1195, 4
    %v1199 = vsub.f32 %v970, %v1197
    %v1201 = vrot.slane %v1199, 4
    %v1203 = vmul.f32 %v1087, %v1201
    %v1204 = vadd.f32 %v1195, %v1203
    %1205 = vst [vmem:[#allocation10 + $0x8] sm:$0xf0] %v1204
    %v1206 = vld [vmem:[#allocation3 + $0x30] sm:$0xf]
    %v1207 = vld [vmem:[#allocation3 + $0x38] sm:$0xf]
    %v1208 = vld [vmem:[#allocation3 + $0x40] sm:$0xf]
    %v1209 = vld [vmem:[#allocation4] sm:$0xff]
    %v1210 = vld [vmem:[#allocation4 + $0x8] sm:$0xff]
    %v1211 = vld [vmem:[#allocation4 + $0x10] sm:$0xff]
    %v1212 = vld [vmem:[#allocation4 + $0x18] sm:$0xff]
    %v1213 = vld [vmem:[#allocation4 + $0x20] sm:$0xff]
    %v1214 = vld [vmem:[#allocation4 + $0x28] sm:$0xff]
    %v1215 = vld [vmem:[#allocation4 + $0x30] sm:$0xff]
    %v1216 = vld [vmem:[#allocation4 + $0x38] sm:$0xff]
    %v1217 = vld [vmem:[#allocation4 + $0x40] sm:$0xff]
    %v1218 = vld [vmem:[#allocation4 + $0x48] sm:$0xff]
    %v1219 = vld [vmem:[#allocation4 + $0x50] sm:$0xff]
    %v1220 = vld [vmem:[#allocation4 + $0x58] sm:$0xff]
    %v1221 = vld [vmem:[#allocation4 + $0x60] sm:$0xff]
    %v1222 = vld [vmem:[#allocation4 + $0x68] sm:$0xff]
    %v1223 = vld [vmem:[#allocation4 + $0x70] sm:$0xff]
    %v1224 = vld [vmem:[#allocation4 + $0x78] sm:$0xff]
    %v1225 = vld [vmem:[#allocation4 + $0x80] sm:$0xff]
    %v1226 = vld [vmem:[#allocation4 + $0x88] sm:$0xff]
    %v1227 = vld [vmem:[#allocation4 + $0x90] sm:$0xff]
    %v1228 = vld [vmem:[#allocation4 + $0x98] sm:$0xff]
    %v1229 = vld [vmem:[#allocation4 + $0xa0] sm:$0xff]
    %v1230 = vld [vmem:[#allocation4 + $0xa8] sm:$0xff]
    %v1231 = vld [vmem:[#allocation4 + $0xb0] sm:$0xff]
    %v1232 = vld [vmem:[#allocation4 + $0xb8] sm:$0xff]
    %v1233 = vld [vmem:[#allocation4 + $0xc0] sm:$0xff]
    %v1234 = vld [vmem:[#allocation4 + $0xc8] sm:$0xff]
    %v1235 = vld [vmem:[#allocation4 + $0xd0] sm:$0xff]
    %v1236 = vld [vmem:[#allocation4 + $0xd8] sm:$0xff]
    %v1237 = vld [vmem:[#allocation4 + $0xe0] sm:$0xff]
    %v1238 = vld [vmem:[#allocation4 + $0xe8] sm:$0xff]
    %v1239 = vld [vmem:[#allocation4 + $0xf0] sm:$0xff]
    %v1240 = vld [vmem:[#allocation4 + $0xf8] sm:$0xff]
    %v1242 = vrot.slane %v1204, 4
    %1244 = vmatprep.subr.mxu0 %v1210
    %1245 = vmatpush1.msra.mxu0 %v1209
    %1246 = vmatprep.subr.mxu0 %v1212
    %1247 = vmatpush1.msra.mxu0 %v1211
    %1248 = vmatprep.subr.mxu0 %v1214
    %1249 = vmatpush1.msra.mxu0 %v1213
    %1250 = vmatprep.subr.mxu0 %v1216
    %1251 = vmatpush1.msra.mxu0 %v1215
    %1252 = vmatprep.subr.mxu0 %v1218
    %1253 = vmatpush1.msra.mxu0 %v1217
    %1254 = vmatprep.subr.mxu0 %v1220
    %1255 = vmatpush1.msra.mxu0 %v1219
    %1256 = vmatprep.subr.mxu0 %v1222
    %1257 = vmatpush1.msra.mxu0 %v1221
    %1258 = vmatprep.subr.mxu0 %v1224
    %1259 = vmatpush1.msra.mxu0 %v1223
    %1260 = vmatprep.subr.mxu0 %v1226
    %1261 = vmatpush1.msra.mxu0 %v1225
    %1262 = vmatprep.subr.mxu0 %v1228
    %1263 = vmatpush1.msra.mxu0 %v1227
    %1264 = vmatprep.subr.mxu0 %v1230
    %1265 = vmatpush1.msra.mxu0 %v1229
    %1266 = vmatprep.subr.mxu0 %v1232
    %1267 = vmatpush1.msra.mxu0 %v1231
    %1268 = vmatprep.subr.mxu0 %v1234
    %1269 = vmatpush1.msra.mxu0 %v1233
    %1270 = vmatprep.subr.mxu0 %v1236
    %1271 = vmatpush1.msra.mxu0 %v1235
    %1272 = vmatprep.subr.mxu0 %v1238
    %1273 = vmatpush1.msra.mxu0 %v1237
    %1274 = vmatprep.subr.mxu0 %v1240
    %1275 = vmatpush1.msra.mxu0 %v1239
    %1276 = vmatprep.subr.mxu0 0.0
    %1277 = vmatpush1.msra.mxu0 0.0
    %1278 = vmatprep.subr.mxu0 0.0
    %1279 = vmatpush1.msra.mxu0 0.0
    %1280 = vmatprep.subr.mxu0 0.0
    %1281 = vmatpush1.msra.mxu0 0.0
    %1282 = vmatprep.subr.mxu0 0.0
    %1283 = vmatpush1.msra.mxu0 0.0
    %1284 = vmatprep.subr.mxu0 0.0
    %1285 = vmatpush1.msra.mxu0 0.0
    %1286 = vmatprep.subr.mxu0 0.0
    %1287 = vmatpush1.msra.mxu0 0.0
    %1288 = vmatprep.subr.mxu0 0.0
    %1289 = vmatpush1.msra.mxu0 0.0
    %1290 = vmatprep.subr.mxu0 0.0
    %1291 = vmatpush1.msra.mxu0 0.0
    %1292 = vmatprep.subr.mxu0 0.0
    %1293 = vmatpush1.msra.mxu0 0.0
    %1294 = vmatprep.subr.mxu0 0.0
    %1295 = vmatpush1.msra.mxu0 0.0
    %1296 = vmatprep.subr.mxu0 0.0
    %1297 = vmatpush1.msra.mxu0 0.0
    %1298 = vmatprep.subr.mxu0 0.0
    %1299 = vmatpush1.msra.mxu0 0.0
    %1300 = vmatprep.subr.mxu0 0.0
    %1301 = vmatpush1.msra.mxu0 0.0
    %1302 = vmatprep.subr.mxu0 0.0
    %1303 = vmatpush1.msra.mxu0 0.0
    %1304 = vmatprep.subr.mxu0 0.0
    %1305 = vmatpush1.msra.mxu0 0.0
    %1306 = vmatprep.subr.mxu0 0.0
    %1307 = vmatpush1.msra.mxu0 0.0
    %1308 = vmatprep.mubr.f32.mxu0 0.0
    %1309 = vmatmul.mubr.f32.gmra.mrb[0].mxu0 %v1242
    %v1310 = vpop.f32.mrb[0].mxu0
    %v1311 = vadd.f32 0.0, %v1310
    %v1312 = vpop.f32.mrb[0].mxu0
    %v1313 = vadd.f32 0.0, %v1312
    %1314 = vdwg.mxu0
    %v1315 = vadd.f32 %v1206, %v1311
    %v1316 = vxor.u32 %v1315, 2147483648
    %v1317 = vmul.f32 %v1316, 1.442695
    %v1318 = vpow.pop %v1317
    %v1319 = vadd.f32 %v1318, 1.0
    %v1320 = vrcp.pop %v1319
    %v1321 = vmul.f32 1.0, %v1320
    %v1322 = vadd.f32 %v1207, %v1313
    %v1323 = vxor.u32 %v1322, 2147483648
    %v1324 = vmul.f32 %v1323, 1.442695
    %v1325 = vpow.pop %v1324
    %v1326 = vadd.f32 %v1325, 1.0
    %v1327 = vrcp.pop %v1326
    %v1328 = vmul.f32 1.0, %v1327
    %v1329 = vmul.f32 %v1328, %v1242
    %v1330 = vld [vmem:[#allocation7] sm:$0xff]
    %v1331 = vld [vmem:[#allocation7 + $0x8] sm:$0xff]
    %v1332 = vld [vmem:[#allocation7 + $0x10] sm:$0xff]
    %v1333 = vld [vmem:[#allocation7 + $0x18] sm:$0xff]
    %v1334 = vld [vmem:[#allocation7 + $0x20] sm:$0xff]
    %v1335 = vld [vmem:[#allocation7 + $0x28] sm:$0xff]
    %v1336 = vld [vmem:[#allocation7 + $0x30] sm:$0xff]
    %v1337 = vld [vmem:[#allocation7 + $0x38] sm:$0xff]
    %v1338 = vld [vmem:[#allocation7 + $0x40] sm:$0xff]
    %v1339 = vld [vmem:[#allocation7 + $0x48] sm:$0xff]
    %v1340 = vld [vmem:[#allocation7 + $0x50] sm:$0xff]
    %v1341 = vld [vmem:[#allocation7 + $0x58] sm:$0xff]
    %v1342 = vld [vmem:[#allocation7 + $0x60] sm:$0xff]
    %v1343 = vld [vmem:[#allocation7 + $0x68] sm:$0xff]
    %v1344 = vld [vmem:[#allocation7 + $0x70] sm:$0xff]
    %v1345 = vld [vmem:[#allocation7 + $0x78] sm:$0xff]
    %1346 = vmatprep.subr.mxu0 0.0
    %1347 = vmatpush1.msra.mxu0 %v1330
    %1348 = vmatprep.subr.mxu0 0.0
    %1349 = vmatpush1.msra.mxu0 %v1331
    %1350 = vmatprep.subr.mxu0 0.0
    %1351 = vmatpush1.msra.mxu0 %v1332
    %1352 = vmatprep.subr.mxu0 0.0
    %1353 = vmatpush1.msra.mxu0 %v1333
    %1354 = vmatprep.subr.mxu0 0.0
    %1355 = vmatpush1.msra.mxu0 %v1334
    %1356 = vmatprep.subr.mxu0 0.0
    %1357 = vmatpush1.msra.mxu0 %v1335
    %1358 = vmatprep.subr.mxu0 0.0
    %1359 = vmatpush1.msra.mxu0 %v1336
    %1360 = vmatprep.subr.mxu0 0.0
    %1361 = vmatpush1.msra.mxu0 %v1337
    %1362 = vmatprep.subr.mxu0 0.0
    %1363 = vmatpush1.msra.mxu0 %v1338
    %1364 = vmatprep.subr.mxu0 0.0
    %1365 = vmatpush1.msra.mxu0 %v1339
    %1366 = vmatprep.subr.mxu0 0.0
    %1367 = vmatpush1.msra.mxu0 %v1340
    %1368 = vmatprep.subr.mxu0 0.0
    %1369 = vmatpush1.msra.mxu0 %v1341
    %1370 = vmatprep.subr.mxu0 0.0
    %1371 = vmatpush1.msra.mxu0 %v1342
    %1372 = vmatprep.subr.mxu0 0.0
    %1373 = vmatpush1.msra.mxu0 %v1343
    %1374 = vmatprep.subr.mxu0 0.0
    %1375 = vmatpush1.msra.mxu0 %v1344
    %1376 = vmatprep.subr.mxu0 0.0
    %1377 = vmatpush1.msra.mxu0 %v1345
    %1378 = vmatprep.subr.mxu0 0.0
    %1379 = vmatpush1.msra.mxu0 0.0
    %1380 = vmatprep.subr.mxu0 0.0
    %1381 = vmatpush1.msra.mxu0 0.0
    %1382 = vmatprep.subr.mxu0 0.0
    %1383 = vmatpush1.msra.mxu0 0.0
    %1384 = vmatprep.subr.mxu0 0.0
    %1385 = vmatpush1.msra.mxu0 0.0
    %1386 = vmatprep.subr.mxu0 0.0
    %1387 = vmatpush1.msra.mxu0 0.0
    %1388 = vmatprep.subr.mxu0 0.0
    %1389 = vmatpush1.msra.mxu0 0.0
    %1390 = vmatprep.subr.mxu0 0.0
    %1391 = vmatpush1.msra.mxu0 0.0
    %1392 = vmatprep.subr.mxu0 0.0
    %1393 = vmatpush1.msra.mxu0 0.0
    %1394 = vmatprep.subr.mxu0 0.0
    %1395 = vmatpush1.msra.mxu0 0.0
    %1396 = vmatprep.subr.mxu0 0.0
    %1397 = vmatpush1.msra.mxu0 0.0
    %1398 = vmatprep.subr.mxu0 0.0
    %1399 = vmatpush1.msra.mxu0 0.0
    %1400 = vmatprep.subr.mxu0 0.0
    %1401 = vmatpush1.msra.mxu0 0.0
    %1402 = vmatprep.subr.mxu0 0.0
    %1403 = vmatpush1.msra.mxu0 0.0
    %1404 = vmatprep.subr.mxu0 0.0
    %1405 = vmatpush1.msra.mxu0 0.0
    %1406 = vmatprep.subr.mxu0 0.0
    %1407 = vmatpush1.msra.mxu0 0.0
    %1408 = vmatprep.subr.mxu0 0.0
    %1409 = vmatpush1.msra.mxu0 0.0
    %1410 = vmatprep.mubr.f32.mxu0 0.0
    %1411 = vmatmul.mubr.f32.gmra.mrb[0].mxu0 %v1329
    %v1412 = vpop.f32.mrb[0].mxu0
    %v1413 = vadd.f32 0.0, %v1412
    %v1414 = vpop.f32.mrb[0].mxu0
    %1415 = vdwg.mxu0
    %v1416 = vadd.f32 %v1208, %v1413
    %v1417 = vtanh.pop %v1416
    %v1419 = vrot.slane %v1417, 4
    %v1421 = vsub.f32 %v1204, %v1419
    %v1423 = vrot.slane %v1421, 4
    %v1425 = vmul.f32 %v1321, %v1423
    %v1426 = vadd.f32 %v1417, %v1425
    %1427 = vst [vmem:[#allocation10 + $0x10] sm:$0xf] %v1426
    %v1428 = vld [vmem:[#allocation3 + $0x30] sm:$0xf0]
    %v1429 = vld [vmem:[#allocation3 + $0x38] sm:$0xf0]
    %v1430 = vld [vmem:[#allocation3 + $0x40] sm:$0xf0]
    %v1431 = vld [vmem:[#allocation4] sm:$0xff]
    %v1432 = vld [vmem:[#allocation4 + $0x8] sm:$0xff]
    %v1433 = vld [vmem:[#allocation4 + $0x10] sm:$0xff]
    %v1434 = vld [vmem:[#allocation4 + $0x18] sm:$0xff]
    %v1435 = vld [vmem:[#allocation4 + $0x20] sm:$0xff]
    %v1436 = vld [vmem:[#allocation4 + $0x28] sm:$0xff]
    %v1437 = vld [vmem:[#allocation4 + $0x30] sm:$0xff]
    %v1438 = vld [vmem:[#allocation4 + $0x38] sm:$0xff]
    %v1439 = vld [vmem:[#allocation4 + $0x40] sm:$0xff]
    %v1440 = vld [vmem:[#allocation4 + $0x48] sm:$0xff]
    %v1441 = vld [vmem:[#allocation4 + $0x50] sm:$0xff]
    %v1442 = vld [vmem:[#allocation4 + $0x58] sm:$0xff]
    %v1443 = vld [vmem:[#allocation4 + $0x60] sm:$0xff]
    %v1444 = vld [vmem:[#allocation4 + $0x68] sm:$0xff]
    %v1445 = vld [vmem:[#allocation4 + $0x70] sm:$0xff]
    %v1446 = vld [vmem:[#allocation4 + $0x78] sm:$0xff]
    %v1447 = vld [vmem:[#allocation4 + $0x80] sm:$0xff]
    %v1448 = vld [vmem:[#allocation4 + $0x88] sm:$0xff]
    %v1449 = vld [vmem:[#allocation4 + $0x90] sm:$0xff]
    %v1450 = vld [vmem:[#allocation4 + $0x98] sm:$0xff]
    %v1451 = vld [vmem:[#allocation4 + $0xa0] sm:$0xff]
    %v1452 = vld [vmem:[#allocation4 + $0xa8] sm:$0xff]
    %v1453 = vld [vmem:[#allocation4 + $0xb0] sm:$0xff]
    %v1454 = vld [vmem:[#allocation4 + $0xb8] sm:$0xff]
    %v1455 = vld [vmem:[#allocation4 + $0xc0] sm:$0xff]
    %v1456 = vld [vmem:[#allocation4 + $0xc8] sm:$0xff]
    %v1457 = vld [vmem:[#allocation4 + $0xd0] sm:$0xff]
    %v1458 = vld [vmem:[#allocation4 + $0xd8] sm:$0xff]
    %v1459 = vld [vmem:[#allocation4 + $0xe0] sm:$0xff]
    %v1460 = vld [vmem:[#allocation4 + $0xe8] sm:$0xff]
    %v1461 = vld [vmem:[#allocation4 + $0xf0] sm:$0xff]
    %v1462 = vld [vmem:[#allocation4 + $0xf8] sm:$0xff]
    %1463 = vmatprep.subr.mxu0 %v1432
    %1464 = vmatpush1.msra.mxu0 %v1431
    %1465 = vmatprep.subr.mxu0 %v1434
    %1466 = vmatpush1.msra.mxu0 %v1433
    %1467 = vmatprep.subr.mxu0 %v1436
    %1468 = vmatpush1.msra.mxu0 %v1435
    %1469 = vmatprep.subr.mxu0 %v1438
    %1470 = vmatpush1.msra.mxu0 %v1437
    %1471 = vmatprep.subr.mxu0 %v1440
    %1472 = vmatpush1.msra.mxu0 %v1439
    %1473 = vmatprep.subr.mxu0 %v1442
    %1474 = vmatpush1.msra.mxu0 %v1441
    %1475 = vmatprep.subr.mxu0 %v1444
    %1476 = vmatpush1.msra.mxu0 %v1443
    %1477 = vmatprep.subr.mxu0 %v1446
    %1478 = vmatpush1.msra.mxu0 %v1445
    %1479 = vmatprep.subr.mxu0 %v1448
    %1480 = vmatpush1.msra.mxu0 %v1447
    %1481 = vmatprep.subr.mxu0 %v1450
    %1482 = vmatpush1.msra.mxu0 %v1449
    %1483 = vmatprep.subr.mxu0 %v1452
    %1484 = vmatpush1.msra.mxu0 %v1451
    %1485 = vmatprep.subr.mxu0 %v1454
    %1486 = vmatpush1.msra.mxu0 %v1453
    %1487 = vmatprep.subr.mxu0 %v1456
    %1488 = vmatpush1.msra.mxu0 %v1455
    %1489 = vmatprep.subr.mxu0 %v1458
    %1490 = vmatpush1.msra.mxu0 %v1457
    %1491 = vmatprep.subr.mxu0 %v1460
    %1492 = vmatpush1.msra.mxu0 %v1459
    %1493 = vmatprep.subr.mxu0 %v1462
    %1494 = vmatpush1.msra.mxu0 %v1461
    %1495 = vmatprep.subr.mxu0 0.0
    %1496 = vmatpush1.msra.mxu0 0.0
    %1497 = vmatprep.subr.mxu0 0.0
    %1498 = vmatpush1.msra.mxu0 0.0
    %1499 = vmatprep.subr.mxu0 0.0
    %1500 = vmatpush1.msra.mxu0 0.0
    %1501 = vmatprep.subr.mxu0 0.0
    %1502 = vmatpush1.msra.mxu0 0.0
    %1503 = vmatprep.subr.mxu0 0.0
    %1504 = vmatpush1.msra.mxu0 0.0
    %1505 = vmatprep.subr.mxu0 0.0
    %1506 = vmatpush1.msra.mxu0 0.0
    %1507 = vmatprep.subr.mxu0 0.0
    %1508 = vmatpush1.msra.mxu0 0.0
    %1509 = vmatprep.subr.mxu0 0.0
    %1510 = vmatpush1.msra.mxu0 0.0
    %1511 = vmatprep.subr.mxu0 0.0
    %1512 = vmatpush1.msra.mxu0 0.0
    %1513 = vmatprep.subr.mxu0 0.0
    %1514 = vmatpush1.msra.mxu0 0.0
    %1515 = vmatprep.subr.mxu0 0.0
    %1516 = vmatpush1.msra.mxu0 0.0
    %1517 = vmatprep.subr.mxu0 0.0
    %1518 = vmatpush1.msra.mxu0 0.0
    %1519 = vmatprep.subr.mxu0 0.0
    %1520 = vmatpush1.msra.mxu0 0.0
    %1521 = vmatprep.subr.mxu0 0.0
    %1522 = vmatpush1.msra.mxu0 0.0
    %1523 = vmatprep.subr.mxu0 0.0
    %1524 = vmatpush1.msra.mxu0 0.0
    %1525 = vmatprep.subr.mxu0 0.0
    %1526 = vmatpush1.msra.mxu0 0.0
    %1527 = vmatprep.mubr.f32.mxu0 0.0
    %1528 = vmatmul.mubr.f32.gmra.mrb[0].mxu0 %v1426
    %v1529 = vpop.f32.mrb[0].mxu0
    %v1530 = vadd.f32 0.0, %v1529
    %v1531 = vpop.f32.mrb[0].mxu0
    %v1532 = vadd.f32 0.0, %v1531
    %1533 = vdwg.mxu0
    %v1535 = vrot.slane %v1530, 4
    %v1537 = vadd.f32 %v1428, %v1535
    %v1538 = vxor.u32 %v1537, 2147483648
    %v1539 = vmul.f32 %v1538, 1.442695
    %v1540 = vpow.pop %v1539
    %v1541 = vadd.f32 %v1540, 1.0
    %v1542 = vrcp.pop %v1541
    %v1543 = vmul.f32 1.0, %v1542
    %v1545 = vrot.slane %v1532, 4
    %v1547 = vadd.f32 %v1429, %v1545
    %v1548 = vxor.u32 %v1547, 2147483648
    %v1549 = vmul.f32 %v1548, 1.442695
    %v1550 = vpow.pop %v1549
    %v1551 = vadd.f32 %v1550, 1.0
    %v1552 = vrcp.pop %v1551
    %v1553 = vmul.f32 1.0, %v1552
    %v1555 = vrot.slane %v1426, 4
    %v1557 = vmul.f32 %v1553, %v1555
    %v1558 = vld [vmem:[#allocation7] sm:$0xff]
    %v1559 = vld [vmem:[#allocation7 + $0x8] sm:$0xff]
    %v1560 = vld [vmem:[#allocation7 + $0x10] sm:$0xff]
    %v1561 = vld [vmem:[#allocation7 + $0x18] sm:$0xff]
    %v1562 = vld [vmem:[#allocation7 + $0x20] sm:$0xff]
    %v1563 = vld [vmem:[#allocation7 + $0x28] sm:$0xff]
    %v1564 = vld [vmem:[#allocation7 + $0x30] sm:$0xff]
    %v1565 = vld [vmem:[#allocation7 + $0x38] sm:$0xff]
    %v1566 = vld [vmem:[#allocation7 + $0x40] sm:$0xff]
    %v1567 = vld [vmem:[#allocation7 + $0x48] sm:$0xff]
    %v1568 = vld [vmem:[#allocation7 + $0x50] sm:$0xff]
    %v1569 = vld [vmem:[#allocation7 + $0x58] sm:$0xff]
    %v1570 = vld [vmem:[#allocation7 + $0x60] sm:$0xff]
    %v1571 = vld [vmem:[#allocation7 + $0x68] sm:$0xff]
    %v1572 = vld [vmem:[#allocation7 + $0x70] sm:$0xff]
    %v1573 = vld [vmem:[#allocation7 + $0x78] sm:$0xff]
    %v1575 = vrot.slane %v1557, 4
    %1577 = vmatprep.subr.mxu0 0.0
    %1578 = vmatpush1.msra.mxu0 %v1558
    %1579 = vmatprep.subr.mxu0 0.0
    %1580 = vmatpush1.msra.mxu0 %v1559
    %1581 = vmatprep.subr.mxu0 0.0
    %1582 = vmatpush1.msra.mxu0 %v1560
    %1583 = vmatprep.subr.mxu0 0.0
    %1584 = vmatpush1.msra.mxu0 %v1561
    %1585 = vmatprep.subr.mxu0 0.0
    %1586 = vmatpush1.msra.mxu0 %v1562
    %1587 = vmatprep.subr.mxu0 0.0
    %1588 = vmatpush1.msra.mxu0 %v1563
    %1589 = vmatprep.subr.mxu0 0.0
    %1590 = vmatpush1.msra.mxu0 %v1564
    %1591 = vmatprep.subr.mxu0 0.0
    %1592 = vmatpush1.msra.mxu0 %v1565
    %1593 = vmatprep.subr.mxu0 0.0
    %1594 = vmatpush1.msra.mxu0 %v1566
    %1595 = vmatprep.subr.mxu0 0.0
    %1596 = vmatpush1.msra.mxu0 %v1567
    %1597 = vmatprep.subr.mxu0 0.0
    %1598 = vmatpush1.msra.mxu0 %v1568
    %1599 = vmatprep.subr.mxu0 0.0
    %1600 = vmatpush1.msra.mxu0 %v1569
    %1601 = vmatprep.subr.mxu0 0.0
    %1602 = vmatpush1.msra.mxu0 %v1570
    %1603 = vmatprep.subr.mxu0 0.0
    %1604 = vmatpush1.msra.mxu0 %v1571
    %1605 = vmatprep.subr.mxu0 0.0
    %1606 = vmatpush1.msra.mxu0 %v1572
    %1607 = vmatprep.subr.mxu0 0.0
    %1608 = vmatpush1.msra.mxu0 %v1573
    %1609 = vmatprep.subr.mxu0 0.0
    %1610 = vmatpush1.msra.mxu0 0.0
    %1611 = vmatprep.subr.mxu0 0.0
    %1612 = vmatpush1.msra.mxu0 0.0
    %1613 = vmatprep.subr.mxu0 0.0
    %1614 = vmatpush1.msra.mxu0 0.0
    %1615 = vmatprep.subr.mxu0 0.0
    %1616 = vmatpush1.msra.mxu0 0.0
    %1617 = vmatprep.subr.mxu0 0.0
    %1618 = vmatpush1.msra.mxu0 0.0
    %1619 = vmatprep.subr.mxu0 0.0
    %1620 = vmatpush1.msra.mxu0 0.0
    %1621 = vmatprep.subr.mxu0 0.0
    %1622 = vmatpush1.msra.mxu0 0.0
    %1623 = vmatprep.subr.mxu0 0.0
    %1624 = vmatpush1.msra.mxu0 0.0
    %1625 = vmatprep.subr.mxu0 0.0
    %1626 = vmatpush1.msra.mxu0 0.0
    %1627 = vmatprep.subr.mxu0 0.0
    %1628 = vmatpush1.msra.mxu0 0.0
    %1629 = vmatprep.subr.mxu0 0.0
    %1630 = vmatpush1.msra.mxu0 0.0
    %1631 = vmatprep.subr.mxu0 0.0
    %1632 = vmatpush1.msra.mxu0 0.0
    %1633 = vmatprep.subr.mxu0 0.0
    %1634 = vmatpush1.msra.mxu0 0.0
    %1635 = vmatprep.subr.mxu0 0.0
    %1636 = vmatpush1.msra.mxu0 0.0
    %1637 = vmatprep.subr.mxu0 0.0
    %1638 = vmatpush1.msra.mxu0 0.0
    %1639 = vmatprep.subr.mxu0 0.0
    %1640 = vmatpush1.msra.mxu0 0.0
    %1641 = vmatprep.mubr.f32.mxu0 0.0
    %1642 = vmatmul.mubr.f32.gmra.mrb[0].mxu0 %v1575
    %v1643 = vpop.f32.mrb[0].mxu0
    %v1644 = vadd.f32 0.0, %v1643
    %v1645 = vpop.f32.mrb[0].mxu0
    %1646 = vdwg.mxu0
    %v1648 = vrot.slane %v1644, 4
    %v1650 = vadd.f32 %v1430, %v1648
    %v1651 = vtanh.pop %v1650
    %v1653 = vrot.slane %v1651, 4
    %v1655 = vsub.f32 %v1426, %v1653
    %v1657 = vrot.slane %v1655, 4
    %v1659 = vmul.f32 %v1543, %v1657
    %v1660 = vadd.f32 %v1651, %v1659
    %1661 = vst [vmem:[#allocation10 + $0x10] sm:$0xf0] %v1660
    %v1662 = vld [vmem:[#allocation3 + $0x48] sm:$0xf]
    %v1663 = vld [vmem:[#allocation3 + $0x50] sm:$0xf]
    %v1664 = vld [vmem:[#allocation3 + $0x58] sm:$0xf]
    %v1665 = vld [vmem:[#allocation4] sm:$0xff]
    %v1666 = vld [vmem:[#allocation4 + $0x8] sm:$0xff]
    %v1667 = vld [vmem:[#allocation4 + $0x10] sm:$0xff]
    %v1668 = vld [vmem:[#allocation4 + $0x18] sm:$0xff]
    %v1669 = vld [vmem:[#allocation4 + $0x20] sm:$0xff]
    %v1670 = vld [vmem:[#allocation4 + $0x28] sm:$0xff]
    %v1671 = vld [vmem:[#allocation4 + $0x30] sm:$0xff]
    %v1672 = vld [vmem:[#allocation4 + $0x38] sm:$0xff]
    %v1673 = vld [vmem:[#allocation4 + $0x40] sm:$0xff]
    %v1674 = vld [vmem:[#allocation4 + $0x48] sm:$0xff]
    %v1675 = vld [vmem:[#allocation4 + $0x50] sm:$0xff]
    %v1676 = vld [vmem:[#allocation4 + $0x58] sm:$0xff]
    %v1677 = vld [vmem:[#allocation4 + $0x60] sm:$0xff]
    %v1678 = vld [vmem:[#allocation4 + $0x68] sm:$0xff]
    %v1679 = vld [vmem:[#allocation4 + $0x70] sm:$0xff]
    %v1680 = vld [vmem:[#allocation4 + $0x78] sm:$0xff]
    %v1681 = vld [vmem:[#allocation4 + $0x80] sm:$0xff]
    %v1682 = vld [vmem:[#allocation4 + $0x88] sm:$0xff]
    %v1683 = vld [vmem:[#allocation4 + $0x90] sm:$0xff]
    %v1684 = vld [vmem:[#allocation4 + $0x98] sm:$0xff]
    %v1685 = vld [vmem:[#allocation4 + $0xa0] sm:$0xff]
    %v1686 = vld [vmem:[#allocation4 + $0xa8] sm:$0xff]
    %v1687 = vld [vmem:[#allocation4 + $0xb0] sm:$0xff]
    %v1688 = vld [vmem:[#allocation4 + $0xb8] sm:$0xff]
    %v1689 = vld [vmem:[#allocation4 + $0xc0] sm:$0xff]
    %v1690 = vld [vmem:[#allocation4 + $0xc8] sm:$0xff]
    %v1691 = vld [vmem:[#allocation4 + $0xd0] sm:$0xff]
    %v1692 = vld [vmem:[#allocation4 + $0xd8] sm:$0xff]
    %v1693 = vld [vmem:[#allocation4 + $0xe0] sm:$0xff]
    %v1694 = vld [vmem:[#allocation4 + $0xe8] sm:$0xff]
    %v1695 = vld [vmem:[#allocation4 + $0xf0] sm:$0xff]
    %v1696 = vld [vmem:[#allocation4 + $0xf8] sm:$0xff]
    %v1698 = vrot.slane %v1660, 4
    %1700 = vmatprep.subr.mxu0 %v1666
    %1701 = vmatpush1.msra.mxu0 %v1665
    %1702 = vmatprep.subr.mxu0 %v1668
    %1703 = vmatpush1.msra.mxu0 %v1667
    %1704 = vmatprep.subr.mxu0 %v1670
    %1705 = vmatpush1.msra.mxu0 %v1669
    %1706 = vmatprep.subr.mxu0 %v1672
    %1707 = vmatpush1.msra.mxu0 %v1671
    %1708 = vmatprep.subr.mxu0 %v1674
    %1709 = vmatpush1.msra.mxu0 %v1673
    %1710 = vmatprep.subr.mxu0 %v1676
    %1711 = vmatpush1.msra.mxu0 %v1675
    %1712 = vmatprep.subr.mxu0 %v1678
    %1713 = vmatpush1.msra.mxu0 %v1677
    %1714 = vmatprep.subr.mxu0 %v1680
    %1715 = vmatpush1.msra.mxu0 %v1679
    %1716 = vmatprep.subr.mxu0 %v1682
    %1717 = vmatpush1.msra.mxu0 %v1681
    %1718 = vmatprep.subr.mxu0 %v1684
    %1719 = vmatpush1.msra.mxu0 %v1683
    %1720 = vmatprep.subr.mxu0 %v1686
    %1721 = vmatpush1.msra.mxu0 %v1685
    %1722 = vmatprep.subr.mxu0 %v1688
    %1723 = vmatpush1.msra.mxu0 %v1687
    %1724 = vmatprep.subr.mxu0 %v1690
    %1725 = vmatpush1.msra.mxu0 %v1689
    %1726 = vmatprep.subr.mxu0 %v1692
    %1727 = vmatpush1.msra.mxu0 %v1691
    %1728 = vmatprep.subr.mxu0 %v1694
    %1729 = vmatpush1.msra.mxu0 %v1693
    %1730 = vmatprep.subr.mxu0 %v1696
    %1731 = vmatpush1.msra.mxu0 %v1695
    %1732 = vmatprep.subr.mxu0 0.0
    %1733 = vmatpush1.msra.mxu0 0.0
    %1734 = vmatprep.subr.mxu0 0.0
    %1735 = vmatpush1.msra.mxu0 0.0
    %1736 = vmatprep.subr.mxu0 0.0
    %1737 = vmatpush1.msra.mxu0 0.0
    %1738 = vmatprep.subr.mxu0 0.0
    %1739 = vmatpush1.msra.mxu0 0.0
    %1740 = vmatprep.subr.mxu0 0.0
    %1741 = vmatpush1.msra.mxu0 0.0
    %1742 = vmatprep.subr.mxu0 0.0
    %1743 = vmatpush1.msra.mxu0 0.0
    %1744 = vmatprep.subr.mxu0 0.0
    %1745 = vmatpush1.msra.mxu0 0.0
    %1746 = vmatprep.subr.mxu0 0.0
    %1747 = vmatpush1.msra.mxu0 0.0
    %1748 = vmatprep.subr.mxu0 0.0
    %1749 = vmatpush1.msra.mxu0 0.0
    %1750 = vmatprep.subr.mxu0 0.0
    %1751 = vmatpush1.msra.mxu0 0.0
    %1752 = vmatprep.subr.mxu0 0.0
    %1753 = vmatpush1.msra.mxu0 0.0
    %1754 = vmatprep.subr.mxu0 0.0
    %1755 = vmatpush1.msra.mxu0 0.0
    %1756 = vmatprep.subr.mxu0 0.0
    %1757 = vmatpush1.msra.mxu0 0.0
    %1758 = vmatprep.subr.mxu0 0.0
    %1759 = vmatpush1.msra.mxu0 0.0
    %1760 = vmatprep.subr.mxu0 0.0
    %1761 = vmatpush1.msra.mxu0 0.0
    %1762 = vmatprep.subr.mxu0 0.0
    %1763 = vmatpush1.msra.mxu0 0.0
    %1764 = vmatprep.mubr.f32.mxu0 0.0
    %1765 = vmatmul.mubr.f32.gmra.mrb[0].mxu0 %v1698
    %v1766 = vpop.f32.mrb[0].mxu0
    %v1767 = vadd.f32 0.0, %v1766
    %v1768 = vpop.f32.mrb[0].mxu0
    %v1769 = vadd.f32 0.0, %v1768
    %1770 = vdwg.mxu0
    %v1771 = vadd.f32 %v1662, %v1767
    %v1772 = vxor.u32 %v1771, 2147483648
    %v1773 = vmul.f32 %v1772, 1.442695
    %v1774 = vpow.pop %v1773
    %v1775 = vadd.f32 %v1774, 1.0
    %v1776 = vrcp.pop %v1775
    %v1777 = vmul.f32 1.0, %v1776
    %v1778 = vadd.f32 %v1663, %v1769
    %v1779 = vxor.u32 %v1778, 2147483648
    %v1780 = vmul.f32 %v1779, 1.442695
    %v1781 = vpow.pop %v1780
    %v1782 = vadd.f32 %v1781, 1.0
    %v1783 = vrcp.pop %v1782
    %v1784 = vmul.f32 1.0, %v1783
    %v1785 = vmul.f32 %v1784, %v1698
    %v1786 = vld [vmem:[#allocation7] sm:$0xff]
    %v1787 = vld [vmem:[#allocation7 + $0x8] sm:$0xff]
    %v1788 = vld [vmem:[#allocation7 + $0x10] sm:$0xff]
    %v1789 = vld [vmem:[#allocation7 + $0x18] sm:$0xff]
    %v1790 = vld [vmem:[#allocation7 + $0x20] sm:$0xff]
    %v1791 = vld [vmem:[#allocation7 + $0x28] sm:$0xff]
    %v1792 = vld [vmem:[#allocation7 + $0x30] sm:$0xff]
    %v1793 = vld [vmem:[#allocation7 + $0x38] sm:$0xff]
    %v1794 = vld [vmem:[#allocation7 + $0x40] sm:$0xff]
    %v1795 = vld [vmem:[#allocation7 + $0x48] sm:$0xff]
    %v1796 = vld [vmem:[#allocation7 + $0x50] sm:$0xff]
    %v1797 = vld [vmem:[#allocation7 + $0x58] sm:$0xff]
    %v1798 = vld [vmem:[#allocation7 + $0x60] sm:$0xff]
    %v1799 = vld [vmem:[#allocation7 + $0x68] sm:$0xff]
    %v1800 = vld [vmem:[#allocation7 + $0x70] sm:$0xff]
    %v1801 = vld [vmem:[#allocation7 + $0x78] sm:$0xff]
    %1802 = vmatprep.subr.mxu0 0.0
    %1803 = vmatpush1.msra.mxu0 %v1786
    %1804 = vmatprep.subr.mxu0 0.0
    %1805 = vmatpush1.msra.mxu0 %v1787
    %1806 = vmatprep.subr.mxu0 0.0
    %1807 = vmatpush1.msra.mxu0 %v1788
    %1808 = vmatprep.subr.mxu0 0.0
    %1809 = vmatpush1.msra.mxu0 %v1789
    %1810 = vmatprep.subr.mxu0 0.0
    %1811 = vmatpush1.msra.mxu0 %v1790
    %1812 = vmatprep.subr.mxu0 0.0
    %1813 = vmatpush1.msra.mxu0 %v1791
    %1814 = vmatprep.subr.mxu0 0.0
    %1815 = vmatpush1.msra.mxu0 %v1792
    %1816 = vmatprep.subr.mxu0 0.0
    %1817 = vmatpush1.msra.mxu0 %v1793
    %1818 = vmatprep.subr.mxu0 0.0
    %1819 = vmatpush1.msra.mxu0 %v1794
    %1820 = vmatprep.subr.mxu0 0.0
    %1821 = vmatpush1.msra.mxu0 %v1795
    %1822 = vmatprep.subr.mxu0 0.0
    %1823 = vmatpush1.msra.mxu0 %v1796
    %1824 = vmatprep.subr.mxu0 0.0
    %1825 = vmatpush1.msra.mxu0 %v1797
    %1826 = vmatprep.subr.mxu0 0.0
    %1827 = vmatpush1.msra.mxu0 %v1798
    %1828 = vmatprep.subr.mxu0 0.0
    %1829 = vmatpush1.msra.mxu0 %v1799
    %1830 = vmatprep.subr.mxu0 0.0
    %1831 = vmatpush1.msra.mxu0 %v1800
    %1832 = vmatprep.subr.mxu0 0.0
    %1833 = vmatpush1.msra.mxu0 %v1801
    %1834 = vmatprep.subr.mxu0 0.0
    %1835 = vmatpush1.msra.mxu0 0.0
    %1836 = vmatprep.subr.mxu0 0.0
    %1837 = vmatpush1.msra.mxu0 0.0
    %1838 = vmatprep.subr.mxu0 0.0
    %1839 = vmatpush1.msra.mxu0 0.0
    %1840 = vmatprep.subr.mxu0 0.0
    %1841 = vmatpush1.msra.mxu0 0.0
    %1842 = vmatprep.subr.mxu0 0.0
    %1843 = vmatpush1.msra.mxu0 0.0
    %1844 = vmatprep.subr.mxu0 0.0
    %1845 = vmatpush1.msra.mxu0 0.0
    %1846 = vmatprep.subr.mxu0 0.0
    %1847 = vmatpush1.msra.mxu0 0.0
    %1848 = vmatprep.subr.mxu0 0.0
    %1849 = vmatpush1.msra.mxu0 0.0
    %1850 = vmatprep.subr.mxu0 0.0
    %1851 = vmatpush1.msra.mxu0 0.0
    %1852 = vmatprep.subr.mxu0 0.0
    %1853 = vmatpush1.msra.mxu0 0.0
    %1854 = vmatprep.subr.mxu0 0.0
    %1855 = vmatpush1.msra.mxu0 0.0
    %1856 = vmatprep.subr.mxu0 0.0
    %1857 = vmatpush1.msra.mxu0 0.0
    %1858 = vmatprep.subr.mxu0 0.0
    %1859 = vmatpush1.msra.mxu0 0.0
    %1860 = vmatprep.subr.mxu0 0.0
    %1861 = vmatpush1.msra.mxu0 0.0
    %1862 = vmatprep.subr.mxu0 0.0
    %1863 = vmatpush1.msra.mxu0 0.0
    %1864 = vmatprep.subr.mxu0 0.0
    %1865 = vmatpush1.msra.mxu0 0.0
    %1866 = vmatprep.mubr.f32.mxu0 0.0
    %1867 = vmatmul.mubr.f32.gmra.mrb[0].mxu0 %v1785
    %v1868 = vpop.f32.mrb[0].mxu0
    %v1869 = vadd.f32 0.0, %v1868
    %v1870 = vpop.f32.mrb[0].mxu0
    %1871 = vdwg.mxu0
    %v1872 = vadd.f32 %v1664, %v1869
    %v1873 = vtanh.pop %v1872
    %v1875 = vrot.slane %v1873, 4
    %v1877 = vsub.f32 %v1660, %v1875
    %v1879 = vrot.slane %v1877, 4
    %v1881 = vmul.f32 %v1777, %v1879
    %v1882 = vadd.f32 %v1873, %v1881
    %1883 = vst [vmem:[#allocation10 + $0x18] sm:$0xf] %v1882
    %v1884 = vld [vmem:[#allocation3 + $0x48] sm:$0xf0]
    %v1885 = vld [vmem:[#allocation3 + $0x50] sm:$0xf0]
    %v1886 = vld [vmem:[#allocation3 + $0x58] sm:$0xf0]
    %v1887 = vld [vmem:[#allocation4] sm:$0xff]
    %v1888 = vld [vmem:[#allocation4 + $0x8] sm:$0xff]
    %v1889 = vld [vmem:[#allocation4 + $0x10] sm:$0xff]
    %v1890 = vld [vmem:[#allocation4 + $0x18] sm:$0xff]
    %v1891 = vld [vmem:[#allocation4 + $0x20] sm:$0xff]
    %v1892 = vld [vmem:[#allocation4 + $0x28] sm:$0xff]
    %v1893 = vld [vmem:[#allocation4 + $0x30] sm:$0xff]
    %v1894 = vld [vmem:[#allocation4 + $0x38] sm:$0xff]
    %v1895 = vld [vmem:[#allocation4 + $0x40] sm:$0xff]
    %v1896 = vld [vmem:[#allocation4 + $0x48] sm:$0xff]
    %v1897 = vld [vmem:[#allocation4 + $0x50] sm:$0xff]
    %v1898 = vld [vmem:[#allocation4 + $0x58] sm:$0xff]
    %v1899 = vld [vmem:[#allocation4 + $0x60] sm:$0xff]
    %v1900 = vld [vmem:[#allocation4 + $0x68] sm:$0xff]
    %v1901 = vld [vmem:[#allocation4 + $0x70] sm:$0xff]
    %v1902 = vld [vmem:[#allocation4 + $0x78] sm:$0xff]
    %v1903 = vld [vmem:[#allocation4 + $0x80] sm:$0xff]
    %v1904 = vld [vmem:[#allocation4 + $0x88] sm:$0xff]
    %v1905 = vld [vmem:[#allocation4 + $0x90] sm:$0xff]
    %v1906 = vld [vmem:[#allocation4 + $0x98] sm:$0xff]
    %v1907 = vld [vmem:[#allocation4 + $0xa0] sm:$0xff]
    %v1908 = vld [vmem:[#allocation4 + $0xa8] sm:$0xff]
    %v1909 = vld [vmem:[#allocation4 + $0xb0] sm:$0xff]
    %v1910 = vld [vmem:[#allocation4 + $0xb8] sm:$0xff]
    %v1911 = vld [vmem:[#allocation4 + $0xc0] sm:$0xff]
    %v1912 = vld [vmem:[#allocation4 + $0xc8] sm:$0xff]
    %v1913 = vld [vmem:[#allocation4 + $0xd0] sm:$0xff]
    %v1914 = vld [vmem:[#allocation4 + $0xd8] sm:$0xff]
    %v1915 = vld [vmem:[#allocation4 + $0xe0] sm:$0xff]
    %v1916 = vld [vmem:[#allocation4 + $0xe8] sm:$0xff]
    %v1917 = vld [vmem:[#allocation4 + $0xf0] sm:$0xff]
    %v1918 = vld [vmem:[#allocation4 + $0xf8] sm:$0xff]
    %1919 = vmatprep.subr.mxu0 %v1888
    %1920 = vmatpush1.msra.mxu0 %v1887
    %1921 = vmatprep.subr.mxu0 %v1890
    %1922 = vmatpush1.msra.mxu0 %v1889
    %1923 = vmatprep.subr.mxu0 %v1892
    %1924 = vmatpush1.msra.mxu0 %v1891
    %1925 = vmatprep.subr.mxu0 %v1894
    %1926 = vmatpush1.msra.mxu0 %v1893
    %1927 = vmatprep.subr.mxu0 %v1896
    %1928 = vmatpush1.msra.mxu0 %v1895
    %1929 = vmatprep.subr.mxu0 %v1898
    %1930 = vmatpush1.msra.mxu0 %v1897
    %1931 = vmatprep.subr.mxu0 %v1900
    %1932 = vmatpush1.msra.mxu0 %v1899
    %1933 = vmatprep.subr.mxu0 %v1902
    %1934 = vmatpush1.msra.mxu0 %v1901
    %1935 = vmatprep.subr.mxu0 %v1904
    %1936 = vmatpush1.msra.mxu0 %v1903
    %1937 = vmatprep.subr.mxu0 %v1906
    %1938 = vmatpush1.msra.mxu0 %v1905
    %1939 = vmatprep.subr.mxu0 %v1908
    %1940 = vmatpush1.msra.mxu0 %v1907
    %1941 = vmatprep.subr.mxu0 %v1910
    %1942 = vmatpush1.msra.mxu0 %v1909
    %1943 = vmatprep.subr.mxu0 %v1912
    %1944 = vmatpush1.msra.mxu0 %v1911
    %1945 = vmatprep.subr.mxu0 %v1914
    %1946 = vmatpush1.msra.mxu0 %v1913
    %1947 = vmatprep.subr.mxu0 %v1916
    %1948 = vmatpush1.msra.mxu0 %v1915
    %1949 = vmatprep.subr.mxu0 %v1918
    %1950 = vmatpush1.msra.mxu0 %v1917
    %1951 = vmatprep.subr.mxu0 0.0
    %1952 = vmatpush1.msra.mxu0 0.0
    %1953 = vmatprep.subr.mxu0 0.0
    %1954 = vmatpush1.msra.mxu0 0.0
    %1955 = vmatprep.subr.mxu0 0.0
    %1956 = vmatpush1.msra.mxu0 0.0
    %1957 = vmatprep.subr.mxu0 0.0
    %1958 = vmatpush1.msra.mxu0 0.0
    %1959 = vmatprep.subr.mxu0 0.0
    %1960 = vmatpush1.msra.mxu0 0.0
    %1961 = vmatprep.subr.mxu0 0.0
    %1962 = vmatpush1.msra.mxu0 0.0
    %1963 = vmatprep.subr.mxu0 0.0
    %1964 = vmatpush1.msra.mxu0 0.0
    %1965 = vmatprep.subr.mxu0 0.0
    %1966 = vmatpush1.msra.mxu0 0.0
    %1967 = vmatprep.subr.mxu0 0.0
    %1968 = vmatpush1.msra.mxu0 0.0
    %1969 = vmatprep.subr.mxu0 0.0
    %1970 = vmatpush1.msra.mxu0 0.0
    %1971 = vmatprep.subr.mxu0 0.0
    %1972 = vmatpush1.msra.mxu0 0.0
    %1973 = vmatprep.subr.mxu0 0.0
    %1974 = vmatpush1.msra.mxu0 0.0
    %1975 = vmatprep.subr.mxu0 0.0
    %1976 = vmatpush1.msra.mxu0 0.0
    %1977 = vmatprep.subr.mxu0 0.0
    %1978 = vmatpush1.msra.mxu0 0.0
    %1979 = vmatprep.subr.mxu0 0.0
    %1980 = vmatpush1.msra.mxu0 0.0
    %1981 = vmatprep.subr.mxu0 0.0
    %1982 = vmatpush1.msra.mxu0 0.0
    %1983 = vmatprep.mubr.f32.mxu0 0.0
    %1984 = vmatmul.mubr.f32.gmra.mrb[0].mxu0 %v1882
    %v1985 = vpop.f32.mrb[0].mxu0
    %v1986 = vadd.f32 0.0, %v1985
    %v1987 = vpop.f32.mrb[0].mxu0
    %v1988 = vadd.f32 0.0, %v1987
    %1989 = vdwg.mxu0
    %v1991 = vrot.slane %v1986, 4
    %v1993 = vadd.f32 %v1884, %v1991
    %v1994 = vxor.u32 %v1993, 2147483648
    %v1995 = vmul.f32 %v1994, 1.442695
    %v1996 = vpow.pop %v1995
    %v1997 = vadd.f32 %v1996, 1.0
    %v1998 = vrcp.pop %v1997
    %v1999 = vmul.f32 1.0, %v1998
    %v2001 = vrot.slane %v1988, 4
    %v2003 = vadd.f32 %v1885, %v2001
    %v2004 = vxor.u32 %v2003, 2147483648
    %v2005 = vmul.f32 %v2004, 1.442695
    %v2006 = vpow.pop %v2005
    %v2007 = vadd.f32 %v2006, 1.0
    %v2008 = vrcp.pop %v2007
    %v2009 = vmul.f32 1.0, %v2008
    %v2011 = vrot.slane %v1882, 4
    %v2013 = vmul.f32 %v2009, %v2011
    %v2014 = vld [vmem:[#allocation7] sm:$0xff]
    %v2015 = vld [vmem:[#allocation7 + $0x8] sm:$0xff]
    %v2016 = vld [vmem:[#allocation7 + $0x10] sm:$0xff]
    %v2017 = vld [vmem:[#allocation7 + $0x18] sm:$0xff]
    %v2018 = vld [vmem:[#allocation7 + $0x20] sm:$0xff]
    %v2019 = vld [vmem:[#allocation7 + $0x28] sm:$0xff]
    %v2020 = vld [vmem:[#allocation7 + $0x30] sm:$0xff]
    %v2021 = vld [vmem:[#allocation7 + $0x38] sm:$0xff]
    %v2022 = vld [vmem:[#allocation7 + $0x40] sm:$0xff]
    %v2023 = vld [vmem:[#allocation7 + $0x48] sm:$0xff]
    %v2024 = vld [vmem:[#allocation7 + $0x50] sm:$0xff]
    %v2025 = vld [vmem:[#allocation7 + $0x58] sm:$0xff]
    %v2026 = vld [vmem:[#allocation7 + $0x60] sm:$0xff]
    %v2027 = vld [vmem:[#allocation7 + $0x68] sm:$0xff]
    %v2028 = vld [vmem:[#allocation7 + $0x70] sm:$0xff]
    %v2029 = vld [vmem:[#allocation7 + $0x78] sm:$0xff]
    %v2031 = vrot.slane %v2013, 4
    %2033 = vmatprep.subr.mxu0 0.0
    %2034 = vmatpush1.msra.mxu0 %v2014
    %2035 = vmatprep.subr.mxu0 0.0
    %2036 = vmatpush1.msra.mxu0 %v2015
    %2037 = vmatprep.subr.mxu0 0.0
    %2038 = vmatpush1.msra.mxu0 %v2016
    %2039 = vmatprep.subr.mxu0 0.0
    %2040 = vmatpush1.msra.mxu0 %v2017
    %2041 = vmatprep.subr.mxu0 0.0
    %2042 = vmatpush1.msra.mxu0 %v2018
    %2043 = vmatprep.subr.mxu0 0.0
    %2044 = vmatpush1.msra.mxu0 %v2019
    %2045 = vmatprep.subr.mxu0 0.0
    %2046 = vmatpush1.msra.mxu0 %v2020
    %2047 = vmatprep.subr.mxu0 0.0
    %2048 = vmatpush1.msra.mxu0 %v2021
    %2049 = vmatprep.subr.mxu0 0.0
    %2050 = vmatpush1.msra.mxu0 %v2022
    %2051 = vmatprep.subr.mxu0 0.0
    %2052 = vmatpush1.msra.mxu0 %v2023
    %2053 = vmatprep.subr.mxu0 0.0
    %2054 = vmatpush1.msra.mxu0 %v2024
    %2055 = vmatprep.subr.mxu0 0.0
    %2056 = vmatpush1.msra.mxu0 %v2025
    %2057 = vmatprep.subr.mxu0 0.0
    %2058 = vmatpush1.msra.mxu0 %v2026
    %2059 = vmatprep.subr.mxu0 0.0
    %2060 = vmatpush1.msra.mxu0 %v2027
    %2061 = vmatprep.subr.mxu0 0.0
    %2062 = vmatpush1.msra.mxu0 %v2028
    %2063 = vmatprep.subr.mxu0 0.0
    %2064 = vmatpush1.msra.mxu0 %v2029
    %2065 = vmatprep.subr.mxu0 0.0
    %2066 = vmatpush1.msra.mxu0 0.0
    %2067 = vmatprep.subr.mxu0 0.0
    %2068 = vmatpush1.msra.mxu0 0.0
    %2069 = vmatprep.subr.mxu0 0.0
    %2070 = vmatpush1.msra.mxu0 0.0
    %2071 = vmatprep.subr.mxu0 0.0
    %2072 = vmatpush1.msra.mxu0 0.0
    %2073 = vmatprep.subr.mxu0 0.0
    %2074 = vmatpush1.msra.mxu0 0.0
    %2075 = vmatprep.subr.mxu0 0.0
    %2076 = vmatpush1.msra.mxu0 0.0
    %2077 = vmatprep.subr.mxu0 0.0
    %2078 = vmatpush1.msra.mxu0 0.0
    %2079 = vmatprep.subr.mxu0 0.0
    %2080 = vmatpush1.msra.mxu0 0.0
    %2081 = vmatprep.subr.mxu0 0.0
    %2082 = vmatpush1.msra.mxu0 0.0
    %2083 = vmatprep.subr.mxu0 0.0
    %2084 = vmatpush1.msra.mxu0 0.0
    %2085 = vmatprep.subr.mxu0 0.0
    %2086 = vmatpush1.msra.mxu0 0.0
    %2087 = vmatprep.subr.mxu0 0.0
    %2088 = vmatpush1.msra.mxu0 0.0
    %2089 = vmatprep.subr.mxu0 0.0
    %2090 = vmatpush1.msra.mxu0 0.0
    %2091 = vmatprep.subr.mxu0 0.0
    %2092 = vmatpush1.msra.mxu0 0.0
    %2093 = vmatprep.subr.mxu0 0.0
    %2094 = vmatpush1.msra.mxu0 0.0
    %2095 = vmatprep.subr.mxu0 0.0
    %2096 = vmatpush1.msra.mxu0 0.0
    %2097 = vmatprep.mubr.f32.mxu0 0.0
    %2098 = vmatmul.mubr.f32.gmra.mrb[0].mxu0 %v2031
    %v2099 = vpop.f32.mrb[0].mxu0
    %v2100 = vadd.f32 0.0, %v2099
    %v2101 = vpop.f32.mrb[0].mxu0
    %2102 = vdwg.mxu0
    %v2104 = vrot.slane %v2100, 4
    %v2106 = vadd.f32 %v1886, %v2104
    %v2107 = vtanh.pop %v2106
    %v2109 = vrot.slane %v2107, 4
    %v2111 = vsub.f32 %v1882, %v2109
    %v2113 = vrot.slane %v2111, 4
    %v2115 = vmul.f32 %v1999, %v2113
    %v2116 = vadd.f32 %v2107, %v2115
    %2117 = vst [vmem:[#allocation10 + $0x18] sm:$0xf0] %v2116
    %2118 = vst [vmem:[#allocation2 - $0x4] sm:$0xf0] %v2116
    %v2119 = vld [vmem:[#allocation10] sm:$0xff]
    %v2120 = vld [vmem:[#allocation10 + $0x8] sm:$0xff]
    %v2121 = vld [vmem:[#allocation10 + $0x10] sm:$0xff]
    %v2122 = vld [vmem:[#allocation10 + $0x18] sm:$0xff]
    %v2123 = vmax.f32 %v2119, 0.0
    %v2124 = vmax.f32 %v2120, 0.0
    %v2125 = vmax.f32 %v2121, 0.0
    %v2126 = vmax.f32 %v2122, 0.0
    %v2127 = vld [vmem:[#allocation9] sm:$0xff]
    %v2128 = vld [vmem:[#allocation9 + $0x8] sm:$0xff]
    %v2129 = vld [vmem:[#allocation9 + $0x10] sm:$0xff]
    %v2130 = vld [vmem:[#allocation9 + $0x18] sm:$0xff]
    %v2131 = vld [vmem:[#allocation9 + $0x20] sm:$0xff]
    %v2132 = vld [vmem:[#allocation9 + $0x28] sm:$0xff]
    %v2133 = vld [vmem:[#allocation9 + $0x30] sm:$0xff]
    %v2134 = vld [vmem:[#allocation9 + $0x38] sm:$0xff]
    %v2135 = vld [vmem:[#allocation9 + $0x40] sm:$0xff]
    %v2136 = vld [vmem:[#allocation9 + $0x48] sm:$0xff]
    %v2137 = vld [vmem:[#allocation9 + $0x50] sm:$0xff]
    %v2138 = vld [vmem:[#allocation9 + $0x58] sm:$0xff]
    %v2139 = vld [vmem:[#allocation9 + $0x60] sm:$0xff]
    %v2140 = vld [vmem:[#allocation9 + $0x68] sm:$0xff]
    %v2141 = vld [vmem:[#allocation9 + $0x70] sm:$0xff]
    %v2142 = vld [vmem:[#allocation9 + $0x78] sm:$0xff]
    %v2143 = vld [vmem:[%s6] sm:$0x1]
    %v2145 = vlaneseq
    %v2146 = vshrl.u32 %v2145, 7
    %v2147 = vsub.s32 0, %v2146
    %v2148 = vrot.slane %v2143, %v2147
    %2150 = vmatprep.subr.mxu0 0.0
    %2151 = vmatpush1.msra.mxu0 %v2127
    %2152 = vmatprep.subr.mxu0 0.0
    %2153 = vmatpush1.msra.mxu0 %v2128
    %2154 = vmatprep.subr.mxu0 0.0
    %2155 = vmatpush1.msra.mxu0 %v2129
    %2156 = vmatprep.subr.mxu0 0.0
    %2157 = vmatpush1.msra.mxu0 %v2130
    %2158 = vmatprep.subr.mxu0 0.0
    %2159 = vmatpush1.msra.mxu0 %v2131
    %2160 = vmatprep.subr.mxu0 0.0
    %2161 = vmatpush1.msra.mxu0 %v2132
    %2162 = vmatprep.subr.mxu0 0.0
    %2163 = vmatpush1.msra.mxu0 %v2133
    %2164 = vmatprep.subr.mxu0 0.0
    %2165 = vmatpush1.msra.mxu0 %v2134
    %2166 = vmatprep.subr.mxu0 0.0
    %2167 = vmatpush1.msra.mxu0 %v2135
    %2168 = vmatprep.subr.mxu0 0.0
    %2169 = vmatpush1.msra.mxu0 %v2136
    %2170 = vmatprep.subr.mxu0 0.0
    %2171 = vmatpush1.msra.mxu0 %v2137
    %2172 = vmatprep.subr.mxu0 0.0
    %2173 = vmatpush1.msra.mxu0 %v2138
    %2174 = vmatprep.subr.mxu0 0.0
    %2175 = vmatpush1.msra.mxu0 %v2139
    %2176 = vmatprep.subr.mxu0 0.0
    %2177 = vmatpush1.msra.mxu0 %v2140
    %2178 = vmatprep.subr.mxu0 0.0
    %2179 = vmatpush1.msra.mxu0 %v2141
    %2180 = vmatprep.subr.mxu0 0.0
    %2181 = vmatpush1.msra.mxu0 %v2142
    %2182 = vmatprep.subr.mxu0 0.0
    %2183 = vmatpush1.msra.mxu0 0.0
    %2184 = vmatprep.subr.mxu0 0.0
    %2185 = vmatpush1.msra.mxu0 0.0
    %2186 = vmatprep.subr.mxu0 0.0
    %2187 = vmatpush1.msra.mxu0 0.0
    %2188 = vmatprep.subr.mxu0 0.0
    %2189 = vmatpush1.msra.mxu0 0.0
    %2190 = vmatprep.subr.mxu0 0.0
    %2191 = vmatpush1.msra.mxu0 0.0
    %2192 = vmatprep.subr.mxu0 0.0
    %2193 = vmatpush1.msra.mxu0 0.0
    %2194 = vmatprep.subr.mxu0 0.0
    %2195 = vmatpush1.msra.mxu0 0.0
    %2196 = vmatprep.subr.mxu0 0.0
    %2197 = vmatpush1.msra.mxu0 0.0
    %2198 = vmatprep.subr.mxu0 0.0
    %2199 = vmatpush1.msra.mxu0 0.0
    %2200 = vmatprep.subr.mxu0 0.0
    %2201 = vmatpush1.msra.mxu0 0.0
    %2202 = vmatprep.subr.mxu0 0.0
    %2203 = vmatpush1.msra.mxu0 0.0
    %2204 = vmatprep.subr.mxu0 0.0
    %2205 = vmatpush1.msra.mxu0 0.0
    %2206 = vmatprep.subr.mxu0 0.0
    %2207 = vmatpush1.msra.mxu0 0.0
    %2208 = vmatprep.subr.mxu0 0.0
    %2209 = vmatpush1.msra.mxu0 0.0
    %2210 = vmatprep.subr.mxu0 0.0
    %2211 = vmatpush1.msra.mxu0 0.0
    %2212 = vmatprep.subr.mxu0 0.0
    %2213 = vmatpush1.msra.mxu0 0.0
    %2214 = vmatprep.mubr.f32.mxu0 0.0
    %2215 = vmatmul.mubr.f32.gmra.mrb[0].mxu0 %v2123
    %v2216 = vpop.f32.mrb[0].mxu0
    %v2217 = vadd.f32 %v2148, %v2216
    %v2218 = vpop.f32.mrb[0].mxu0
    %2219 = vmatprep.mubr.f32.mxu0 0.0
    %2220 = vmatmul.mubr.f32.gmra.mrb[0].mxu0 %v2124
    %v2221 = vpop.f32.mrb[0].mxu0
    %v2222 = vadd.f32 %v2148, %v2221
    %v2223 = vpop.f32.mrb[0].mxu0
    %2224 = vmatprep.mubr.f32.mxu0 0.0
    %2225 = vmatmul.mubr.f32.gmra.mrb[0].mxu0 %v2125
    %v2226 = vpop.f32.mrb[0].mxu0
    %v2227 = vadd.f32 %v2148, %v2226
    %v2228 = vpop.f32.mrb[0].mxu0
    %2229 = vmatprep.mubr.f32.mxu0 0.0
    %2230 = vmatmul.mubr.f32.gmra.mrb[0].mxu0 %v2126
    %v2231 = vpop.f32.mrb[0].mxu0
    %v2232 = vadd.f32 %v2148, %v2231
    %v2233 = vpop.f32.mrb[0].mxu0
    %2234 = vdwg.mxu0
    %2235 = vst [vmem:[#allocation11] sm:$0xff] %v2217
    %2236 = vst [vmem:[#allocation11 + $0x8] sm:$0xff] %v2222
    %2237 = vst [vmem:[#allocation11 + $0x10] sm:$0xff] %v2227
    %2238 = vst [vmem:[#allocation11 + $0x18] sm:$0xff] %v2232
    // Predicated region
    $region46: #{tpu_custom_call.1} parent=1 // pred_check
      _
    $region47: #{tpu_custom_call.1} parent=1 // pred_check_branch
      %2240 = sbr.rel (0) target = $region49
    $region48: #{tpu_custom_call.1} parent=1 // pred_region
      %s2242 = ssub.s32 512, 512
      %2243 = vsyncadd [#allocation6], %s2242
      %s2244 = sshll.u32 [#allocation10], 4
      %s2245 = int_to_ptr.vmem [resolvable:$true] %s2244
      %2250 = dma.vmem_to_hbm [thread:$0]  %s2245, 512, %s7, [#allocation6], 128, 128, 8
    $region49: #{tpu_custom_call.1} parent=1 // pred_fallthru
      _
    // Predicated region
    $region50: #{tpu_custom_call.1} parent=1 // pred_check
      _
    $region51: #{tpu_custom_call.1} parent=1 // pred_check_branch
      %2252 = sbr.rel (0) target = $region53
    $region52: #{tpu_custom_call.1} parent=1 // pred_region
      %s2254 = ssub.s32 512, 512
      %2255 = vsyncadd [#allocation12], %s2254
      %s2256 = sshll.u32 [#allocation11], 4
      %s2257 = int_to_ptr.vmem [resolvable:$true] %s2256
      %2262 = dma.vmem_to_hbm [thread:$0]  %s2257, 512, %s8, [#allocation12], 128, 128, 8
    $region53: #{tpu_custom_call.1} parent=1 // pred_fallthru
      _
    // Predicated region
    $region54: #{tpu_custom_call.1} parent=1 // pred_check
      _
    $region55: #{tpu_custom_call.1} parent=1 // pred_check_branch
      %2264 = sbr.rel (0) target = $region57
    $region56: #{tpu_custom_call.1} parent=1 // pred_region
      %2265 = dma.done [#allocation6], 512
    $region57: #{tpu_custom_call.1} parent=1 // pred_fallthru
      _
    // Predicated region
    $region58: #{tpu_custom_call.1} parent=1 // pred_check
      _
    $region59: #{tpu_custom_call.1} parent=1 // pred_check_branch
      %2267 = sbr.rel (0) target = $region61
    $region60: #{tpu_custom_call.1} parent=1 // pred_region
      %2268 = dma.done [#allocation12], 512
    $region61: #{tpu_custom_call.1} parent=1 // pred_fallthru
      _
    %2269 = vsyncpa [#allocation5], 1
    %2270 = vsyncpa [#allocation8], 1
    %2271 = vsyncpa [#allocation6], 1
    %2272 = vsyncpa [#allocation12], 1

</llo_original>
